<compile_context>
chip_gen: v5e
topology: v5e:2x2
jax: 0.10.0
libtpu: 0.0.40
codegen_flags: <defaults>
</compile_context>

<pallas_src>
import functools

import jax
import jax.numpy as jnp
from jax.experimental import pallas as pl
from jax.experimental.pallas import tpu as pltpu


def _round_up(x, m):
    return (x + m - 1) // m * m


def _lstm_recurrence_kernel(xproj_ref, whh_ref, hlast_ref, h_scr, c_scr, *, unroll):
    """One grid step = T_BLK timesteps of the LSTM recurrence for one batch tile.

    xproj_ref: (T_BLK, B_TILE, 4*Hp) f32   precomputed x @ W_ih^T + b (gate order i,f,g,o)
    whh_ref:   (Hp, 4*Hp)                  matmul dtype (bf16 or f32), single-buffered
    hlast_ref: (B_TILE, Hp) f32            written only on the last time block
    h_scr/c_scr: (B_TILE, Hp) f32          recurrent state, persists across time blocks
    """
    tb = pl.program_id(1)

    @pl.when(tb == 0)
    def _():
        h_scr[...] = jnp.zeros_like(h_scr)
        c_scr[...] = jnp.zeros_like(c_scr)

    hp = h_scr.shape[-1]
    whh = whh_ref[...]                       # resident weight (constant index map)
    t_blk = xproj_ref.shape[0]

    def step(i, carry):
        h, c = carry                         # (B_TILE, Hp) f32, live in vregs
        gates = xproj_ref[i] + jnp.dot(h.astype(whh.dtype), whh,
                                       preferred_element_type=jnp.float32)
        # lane-aligned gate slices (Hp is a multiple of 128)
        i_g = jax.nn.sigmoid(gates[:, 0 * hp:1 * hp])
        f_g = jax.nn.sigmoid(gates[:, 1 * hp:2 * hp])
        g_g = jnp.tanh(gates[:, 2 * hp:3 * hp])
        o_g = jax.nn.sigmoid(gates[:, 3 * hp:4 * hp])
        c = f_g * c + i_g * g_g
        h = o_g * jnp.tanh(c)
        return (h, c)

    h_fin, c_fin = jax.lax.fori_loop(0, t_blk, step, (h_scr[...], c_scr[...]),
                                     unroll=unroll)
    h_scr[...] = h_fin
    c_scr[...] = c_fin

    @pl.when(tb == pl.num_programs(1) - 1)
    def _():
        hlast_ref[...] = h_fin


def policy_network_forward(tokens, params, *, matmul_dtype=jnp.bfloat16, t_blk=None):
    """tokens: int32 (B, S). Returns logits (B, vocab_size) float32."""
    emb_table = params["embedding"]          # (V, E)
    w_ih = params["w_ih"]                    # (4H, E)
    w_hh = params["w_hh"]                    # (4H, H)
    b_ih = params["b_ih"]                    # (4H,)
    b_hh = params["b_hh"]                    # (4H,)
    w_fc = params["w_fc"]                    # (V, H)
    b_fc = params["b_fc"]                    # (V,)

    B, S = tokens.shape
    V, E = emb_table.shape
    H = w_hh.shape[1]
    Hp = _round_up(H, 128)                   # lane-aligned gates / state
    Bp = _round_up(B, 8)                     # f32 sublane

    if t_blk is None:
        t_blk = next(t for t in (16, 8, 4, 2, 1) if S % t == 0)
    num_tb = S // t_blk

    # Two parallel batch blocks when possible so v7x's second TensorCore gets work.
    if Bp >= 16 and (Bp // 2) % 8 == 0:
        b_tile = Bp // 2
    else:
        b_tile = Bp
    num_bb = Bp // b_tile

    md = matmul_dtype
    f32 = jnp.float32

    # ---- XLA glue: embedding gather + hoisted input projection (one big matmul) ----
    x = jnp.take(emb_table, tokens, axis=0).astype(f32)                  # (B, S, E)
    bias = (b_ih + b_hh).astype(f32)                                     # (4H,)
    gates_x = jnp.dot(x.astype(md), jnp.transpose(w_ih).astype(md),
                      preferred_element_type=f32) + bias                 # (B, S, 4H) f32
    # pad each gate chunk H -> Hp and batch B -> Bp, then go time-major (S, Bp, 4Hp)
    gates_x = gates_x.reshape(B, S, 4, H)
    gates_x = jnp.pad(gates_x, ((0, Bp - B), (0, 0), (0, 0), (0, Hp - H)))
    x_proj = jnp.transpose(gates_x.reshape(Bp, S, 4 * Hp), (1, 0, 2))    # (S, Bp, 4Hp)

    # W_hh^T padded per gate: (Hp, 4Hp). Padded rows/cols are zero, so padded h/c stay 0.
    whh_t = jnp.transpose(w_hh).reshape(H, 4, H)
    whh_t = jnp.pad(whh_t, ((0, Hp - H), (0, 0), (0, Hp - H)))
    whh_t = whh_t.reshape(Hp, 4 * Hp).astype(md)

    # Explicit VMEM budget (headroom-clamped; safe on v5e/v6e/v7x).
    itemsize = jnp.dtype(md).itemsize
    vmem_need = (2 * t_blk * b_tile * 4 * Hp * 4     # x_proj block, double-buffered
                 + Hp * 4 * Hp * itemsize            # W_hh^T, single-buffered
                 + 2 * b_tile * Hp * 4               # output block, double-buffered
                 + 2 * b_tile * Hp * 4)              # h/c scratch
    vmem_limit = int(min(max(4 * vmem_need, 16 * 2**20), 48 * 2**20))

    h_last_pad = pl.pallas_call(
        functools.partial(_lstm_recurrence_kernel,
                          unroll=True if t_blk <= 8 else 4),
        out_shape=jax.ShapeDtypeStruct((Bp, Hp), f32),
        grid_spec=pltpu.PrefetchScalarGridSpec(
            num_scalar_prefetch=0,
            grid=(num_bb, num_tb),
            in_specs=[
                # streamed per-time-block input projection
                pl.BlockSpec((t_blk, b_tile, 4 * Hp), lambda b, t: (t, b, 0)),
                # constant-index recurrent weight, single-buffered
                pl.BlockSpec((Hp, 4 * Hp), lambda b, t: (0, 0),
                             pipeline_mode=pl.Buffered(1)),
            ],
            out_specs=pl.BlockSpec((b_tile, Hp), lambda b, t: (b, 0)),
            scratch_shapes=[
                pltpu.VMEM((b_tile, Hp), f32),   # h state
                pltpu.VMEM((b_tile, Hp), f32),   # c state
            ],
        ),
        compiler_params=pltpu.CompilerParams(
            dimension_semantics=("parallel", "arbitrary"),
            vmem_limit_bytes=vmem_limit,
        ),
    )(x_proj, whh_t)

    # ---- final FC (used once) evicted from the recurrent kernel; plain XLA GEMM ----
    h_last = h_last_pad[:B, :H]
    logits = jnp.dot(h_last.astype(md), jnp.transpose(w_fc).astype(md),
                     preferred_element_type=f32) + b_fc.astype(f32)
    return logits


def _reference_forward(tokens, params, *, matmul_dtype=jnp.float32):
    """Pure-JAX reference matching torch.nn.LSTM(batch_first=True) semantics.

    matmul_dtype lets the reference mirror the kernel's MXU input precision
    (bf16 inputs, f32 accumulation) for apples-to-apples comparison.
    """
    md = matmul_dtype

    def mdot(a, b):
        return jnp.dot(a.astype(md), b.astype(md), preferred_element_type=jnp.float32)

    emb = jnp.take(params["embedding"], tokens, axis=0).astype(jnp.float32)  # (B, S, E)
    H = params["w_hh"].shape[1]
    wih_t = params["w_ih"].T
    whh_t = params["w_hh"].T
    b = (params["b_ih"] + params["b_hh"]).astype(jnp.float32)

    def step(carry, x_t):
        h, c = carry
        gates = mdot(x_t, wih_t) + mdot(h, whh_t) + b
        i = jax.nn.sigmoid(gates[:, 0 * H:1 * H])
        f = jax.nn.sigmoid(gates[:, 1 * H:2 * H])
        g = jnp.tanh(gates[:, 2 * H:3 * H])
        o = jax.nn.sigmoid(gates[:, 3 * H:4 * H])
        c = f * c + i * g
        h = o * jnp.tanh(c)
        return (h, c), None

    B = tokens.shape[0]
    h0 = jnp.zeros((B, H), jnp.float32)
    c0 = jnp.zeros((B, H), jnp.float32)
    (h_last, _), _ = jax.lax.scan(step, (h0, c0), jnp.transpose(emb, (1, 0, 2)))
    return mdot(h_last, params["w_fc"].T) + params["b_fc"].astype(jnp.float32)


def init_params(key, vocab_size, embedding_dim, hidden_dim):
    ks = jax.random.split(key, 7)
    k = 1.0 / jnp.sqrt(hidden_dim)
    return {
        "embedding": jax.random.normal(ks[0], (vocab_size, embedding_dim), jnp.float32),
        "w_ih": jax.random.uniform(ks[1], (4 * hidden_dim, embedding_dim), jnp.float32, -k, k),
        "w_hh": jax.random.uniform(ks[2], (4 * hidden_dim, hidden_dim), jnp.float32, -k, k),
        "b_ih": jax.random.uniform(ks[3], (4 * hidden_dim,), jnp.float32, -k, k),
        "b_hh": jax.random.uniform(ks[4], (4 * hidden_dim,), jnp.float32, -k, k),
        "w_fc": jax.random.uniform(ks[5], (vocab_size, hidden_dim), jnp.float32, -k, k),
        "b_fc": jax.random.uniform(ks[6], (vocab_size,), jnp.float32, -k, k),
    }


if __name__ == "__main__":
    vocab_size = 16
    embedding_dim = 32
    hidden_dim = 32
    batch = 2
    seq = 8

    key = jax.random.PRNGKey(0)
    k_par, k_tok = jax.random.split(key)
    params = init_params(k_par, vocab_size, embedding_dim, hidden_dim)
    tokens = jax.random.randint(k_tok, (batch, seq), 0, vocab_size, dtype=jnp.int32)

    # Recommended fast path: bf16 MXU inputs, f32 accumulation / gate math.
    logits = jax.block_until_ready(policy_network_forward(tokens, params))
    assert logits.shape == (batch, vocab_size)
    ref_bf16 = _reference_forward(tokens, params, matmul_dtype=jnp.bfloat16)
    assert jnp.allclose(logits, ref_bf16, atol=1e-2, rtol=1e-2), \
        "mismatch vs bf16-precision-matched JAX reference"

    # Full-f32 mode must match the pure-f32 reference tightly.
    logits_f32 = jax.block_until_ready(
        policy_network_forward(tokens, params, matmul_dtype=jnp.float32))
    ref_f32 = _reference_forward(tokens, params, matmul_dtype=jnp.float32)
    assert jnp.allclose(logits_f32, ref_f32, atol=1e-4, rtol=1e-4), \
        "mismatch vs f32 JAX reference"

    print("KERNEL_OK")
</pallas_src>

<mosaic_0001>
module attributes {stable_mosaic.version = 11 : i64} {
  func.func @_lstm_recurrence_kernel(%arg0: i32, %arg1: i32, %arg2: memref<8x8x512xf32, #tpu.memory_space<vmem>>, %arg3: memref<128x512xbf16, #tpu.memory_space<vmem>>, %arg4: memref<8x128xf32, #tpu.memory_space<vmem>>, %arg5: memref<8x128xf32, #tpu.memory_space<vmem>>, %arg6: memref<8x128xf32, #tpu.memory_space<vmem>>) attributes {dimension_semantics = [#tpu.dimension_semantics<parallel>, #tpu.dimension_semantics<arbitrary>], iteration_bounds = array<i64: 1, 1>, scalar_prefetch = 0 : i64, scratch_operands = 2 : i64, tpu.core_type = #tpu.core_type<tc>, window_params = [{transform_indices = @transform_0, window_bounds = array<i64: 8, 8, 512>}, {pipeline_mode = #tpu.pipeline_mode<synchronous>, transform_indices = @transform_1, window_bounds = array<i64: 128, 512>}, {transform_indices = @transform_2, window_bounds = array<i64: 8, 128>}]} {
    %c0_i32 = arith.constant 0 : i32
    %0 = arith.cmpi eq, %arg1, %c0_i32 : i32
    %1 = arith.extui %0 : i1 to i32
    %c0_i32_0 = arith.constant 0 : i32
    %2 = arith.cmpi ne, %1, %c0_i32_0 : i32
    scf.if %2 {
      %cst_60 = arith.constant 0.000000e+00 : f32
      %259 = vector.broadcast %cst_60 : f32 to vector<8x128xf32>
      %c0_61 = arith.constant 0 : index
      %c0_62 = arith.constant 0 : index
      %260 = vector.load %arg5[%c0_61, %c0_62] : memref<8x128xf32, #tpu.memory_space<vmem>>, vector<8x128xf32>
      tpu.vector_store %arg5[%c0_61, %c0_62], %259 {strides = array<i32>} : memref<8x128xf32, #tpu.memory_space<vmem>>, vector<8x128xf32>,
      %cst_63 = arith.constant 0.000000e+00 : f32
      %261 = vector.broadcast %cst_63 : f32 to vector<8x128xf32>
      %c0_64 = arith.constant 0 : index
      %c0_65 = arith.constant 0 : index
      %262 = vector.load %arg6[%c0_64, %c0_65] : memref<8x128xf32, #tpu.memory_space<vmem>>, vector<8x128xf32>
      tpu.vector_store %arg6[%c0_64, %c0_65], %261 {strides = array<i32>} : memref<8x128xf32, #tpu.memory_space<vmem>>, vector<8x128xf32>,
    } else {
    }
    %c0 = arith.constant 0 : index
    %c0_1 = arith.constant 0 : index
    %3 = vector.load %arg3[%c0, %c0_1] : memref<128x512xbf16, #tpu.memory_space<vmem>>, vector<128x512xbf16>
    %c0_2 = arith.constant 0 : index
    %c0_3 = arith.constant 0 : index
    %4 = vector.load %arg5[%c0_2, %c0_3] : memref<8x128xf32, #tpu.memory_space<vmem>>, vector<8x128xf32>
    %c0_4 = arith.constant 0 : index
    %c0_5 = arith.constant 0 : index
    %5 = vector.load %arg6[%c0_4, %c0_5] : memref<8x128xf32, #tpu.memory_space<vmem>>, vector<8x128xf32>
    %c0_i32_6 = arith.constant 0 : i32
    %6 = arith.index_cast %c0_i32_6 : i32 to index
    %c0_7 = arith.constant 0 : index
    %c0_8 = arith.constant 0 : index
    %7 = vector.load %arg2[%6, %c0_7, %c0_8] : memref<8x8x512xf32, #tpu.memory_space<vmem>>, vector<1x8x512xf32>
    %8 = vector.shape_cast %7 : vector<1x8x512xf32> to vector<8x512xf32>
    %9 = arith.truncf %4 : vector<8x128xf32> to vector<8x128xbf16>
    %cst = arith.constant dense<0.000000e+00> : vector<8x512xf32>
    %10 = tpu.matmul %9, %3, %cst {dimension_numbers = #tpu.dot_dimension_numbers<[1], [0], [0], [1], [0, 0, 1, 1], [], []>} : vector<8x128xbf16>, vector<128x512xbf16>, vector<8x512xf32> -> vector<8x512xf32>
    %11 = arith.addf %8, %10 : vector<8x512xf32>
    %12 = vector.extract_strided_slice %11 {offsets = [0, 0], sizes = [8, 128], strides = [1, 1]} : vector<8x512xf32> to vector<8x128xf32>
    %13 = arith.negf %12 : vector<8x128xf32>
    %14 = math.exp %13 : vector<8x128xf32>
    %cst_9 = arith.constant 1.000000e+00 : f32
    %15 = vector.broadcast %cst_9 : f32 to vector<8x128xf32>
    %16 = arith.addf %15, %14 : vector<8x128xf32>
    %17 = arith.divf %15, %16 : vector<8x128xf32>
    %18 = vector.extract_strided_slice %11 {offsets = [0, 128], sizes = [8, 128], strides = [1, 1]} : vector<8x512xf32> to vector<8x128xf32>
    %19 = arith.negf %18 : vector<8x128xf32>
    %20 = math.exp %19 : vector<8x128xf32>
    %cst_10 = arith.constant 1.000000e+00 : f32
    %21 = vector.broadcast %cst_10 : f32 to vector<8x128xf32>
    %22 = arith.addf %21, %20 : vector<8x128xf32>
    %23 = arith.divf %21, %22 : vector<8x128xf32>
    %24 = vector.extract_strided_slice %11 {offsets = [0, 256], sizes = [8, 128], strides = [1, 1]} : vector<8x512xf32> to vector<8x128xf32>
    %25 = math.tanh %24 : vector<8x128xf32>
    %26 = vector.extract_strided_slice %11 {offsets = [0, 384], sizes = [8, 128], strides = [1, 1]} : vector<8x512xf32> to vector<8x128xf32>
    %27 = arith.negf %26 : vector<8x128xf32>
    %28 = math.exp %27 : vector<8x128xf32>
    %cst_11 = arith.constant 1.000000e+00 : f32
    %29 = vector.broadcast %cst_11 : f32 to vector<8x128xf32>
    %30 = arith.addf %29, %28 : vector<8x128xf32>
    %31 = arith.divf %29, %30 : vector<8x128xf32>
    %32 = arith.mulf %23, %5 : vector<8x128xf32>
    %33 = arith.mulf %17, %25 : vector<8x128xf32>
    %34 = arith.addf %32, %33 : vector<8x128xf32>
    %35 = math.tanh %34 : vector<8x128xf32>
    %36 = arith.mulf %31, %35 : vector<8x128xf32>
    %c1_i32 = arith.constant 1 : i32
    %37 = arith.index_cast %c1_i32 : i32 to index
    %c0_12 = arith.constant 0 : index
    %c0_13 = arith.constant 0 : index
    %38 = vector.load %arg2[%37, %c0_12, %c0_13] : memref<8x8x512xf32, #tpu.memory_space<vmem>>, vector<1x8x512xf32>
    %39 = vector.shape_cast %38 : vector<1x8x512xf32> to vector<8x512xf32>
    %40 = arith.truncf %36 : vector<8x128xf32> to vector<8x128xbf16>
    %cst_14 = arith.constant dense<0.000000e+00> : vector<8x512xf32>
    %41 = tpu.matmul %40, %3, %cst_14 {dimension_numbers = #tpu.dot_dimension_numbers<[1], [0], [0], [1], [0, 0, 1, 1], [], []>} : vector<8x128xbf16>, vector<128x512xbf16>, vector<8x512xf32> -> vector<8x512xf32>
    %42 = arith.addf %39, %41 : vector<8x512xf32>
    %43 = vector.extract_strided_slice %42 {offsets = [0, 0], sizes = [8, 128], strides = [1, 1]} : vector<8x512xf32> to vector<8x128xf32>
    %44 = arith.negf %43 : vector<8x128xf32>
    %45 = math.exp %44 : vector<8x128xf32>
    %cst_15 = arith.constant 1.000000e+00 : f32
    %46 = vector.broadcast %cst_15 : f32 to vector<8x128xf32>
    %47 = arith.addf %46, %45 : vector<8x128xf32>
    %48 = arith.divf %46, %47 : vector<8x128xf32>
    %49 = vector.extract_strided_slice %42 {offsets = [0, 128], sizes = [8, 128], strides = [1, 1]} : vector<8x512xf32> to vector<8x128xf32>
    %50 = arith.negf %49 : vector<8x128xf32>
    %51 = math.exp %50 : vector<8x128xf32>
    %cst_16 = arith.constant 1.000000e+00 : f32
    %52 = vector.broadcast %cst_16 : f32 to vector<8x128xf32>
    %53 = arith.addf %52, %51 : vector<8x128xf32>
    %54 = arith.divf %52, %53 : vector<8x128xf32>
    %55 = vector.extract_strided_slice %42 {offsets = [0, 256], sizes = [8, 128], strides = [1, 1]} : vector<8x512xf32> to vector<8x128xf32>
    %56 = math.tanh %55 : vector<8x128xf32>
    %57 = vector.extract_strided_slice %42 {offsets = [0, 384], sizes = [8, 128], strides = [1, 1]} : vector<8x512xf32> to vector<8x128xf32>
    %58 = arith.negf %57 : vector<8x128xf32>
    %59 = math.exp %58 : vector<8x128xf32>
    %cst_17 = arith.constant 1.000000e+00 : f32
    %60 = vector.broadcast %cst_17 : f32 to vector<8x128xf32>
    %61 = arith.addf %60, %59 : vector<8x128xf32>
    %62 = arith.divf %60, %61 : vector<8x128xf32>
    %63 = arith.mulf %54, %34 : vector<8x128xf32>
    %64 = arith.mulf %48, %56 : vector<8x128xf32>
    %65 = arith.addf %63, %64 : vector<8x128xf32>
    %66 = math.tanh %65 : vector<8x128xf32>
    %67 = arith.mulf %62, %66 : vector<8x128xf32>
    %c2_i32 = arith.constant 2 : i32
    %68 = arith.index_cast %c2_i32 : i32 to index
    %c0_18 = arith.constant 0 : index
    %c0_19 = arith.constant 0 : index
    %69 = vector.load %arg2[%68, %c0_18, %c0_19] : memref<8x8x512xf32, #tpu.memory_space<vmem>>, vector<1x8x512xf32>
    %70 = vector.shape_cast %69 : vector<1x8x512xf32> to vector<8x512xf32>
    %71 = arith.truncf %67 : vector<8x128xf32> to vector<8x128xbf16>
    %cst_20 = arith.constant dense<0.000000e+00> : vector<8x512xf32>
    %72 = tpu.matmul %71, %3, %cst_20 {dimension_numbers = #tpu.dot_dimension_numbers<[1], [0], [0], [1], [0, 0, 1, 1], [], []>} : vector<8x128xbf16>, vector<128x512xbf16>, vector<8x512xf32> -> vector<8x512xf32>
    %73 = arith.addf %70, %72 : vector<8x512xf32>
    %74 = vector.extract_strided_slice %73 {offsets = [0, 0], sizes = [8, 128], strides = [1, 1]} : vector<8x512xf32> to vector<8x128xf32>
    %75 = arith.negf %74 : vector<8x128xf32>
    %76 = math.exp %75 : vector<8x128xf32>
    %cst_21 = arith.constant 1.000000e+00 : f32
    %77 = vector.broadcast %cst_21 : f32 to vector<8x128xf32>
    %78 = arith.addf %77, %76 : vector<8x128xf32>
    %79 = arith.divf %77, %78 : vector<8x128xf32>
    %80 = vector.extract_strided_slice %73 {offsets = [0, 128], sizes = [8, 128], strides = [1, 1]} : vector<8x512xf32> to vector<8x128xf32>
    %81 = arith.negf %80 : vector<8x128xf32>
    %82 = math.exp %81 : vector<8x128xf32>
    %cst_22 = arith.constant 1.000000e+00 : f32
    %83 = vector.broadcast %cst_22 : f32 to vector<8x128xf32>
    %84 = arith.addf %83, %82 : vector<8x128xf32>
    %85 = arith.divf %83, %84 : vector<8x128xf32>
    %86 = vector.extract_strided_slice %73 {offsets = [0, 256], sizes = [8, 128], strides = [1, 1]} : vector<8x512xf32> to vector<8x128xf32>
    %87 = math.tanh %86 : vector<8x128xf32>
    %88 = vector.extract_strided_slice %73 {offsets = [0, 384], sizes = [8, 128], strides = [1, 1]} : vector<8x512xf32> to vector<8x128xf32>
    %89 = arith.negf %88 : vector<8x128xf32>
    %90 = math.exp %89 : vector<8x128xf32>
    %cst_23 = arith.constant 1.000000e+00 : f32
    %91 = vector.broadcast %cst_23 : f32 to vector<8x128xf32>
    %92 = arith.addf %91, %90 : vector<8x128xf32>
    %93 = arith.divf %91, %92 : vector<8x128xf32>
    %94 = arith.mulf %85, %65 : vector<8x128xf32>
    %95 = arith.mulf %79, %87 : vector<8x128xf32>
    %96 = arith.addf %94, %95 : vector<8x128xf32>
    %97 = math.tanh %96 : vector<8x128xf32>
    %98 = arith.mulf %93, %97 : vector<8x128xf32>
    %c3_i32 = arith.constant 3 : i32
    %99 = arith.index_cast %c3_i32 : i32 to index
    %c0_24 = arith.constant 0 : index
    %c0_25 = arith.constant 0 : index
    %100 = vector.load %arg2[%99, %c0_24, %c0_25] : memref<8x8x512xf32, #tpu.memory_space<vmem>>, vector<1x8x512xf32>
    %101 = vector.shape_cast %100 : vector<1x8x512xf32> to vector<8x512xf32>
    %102 = arith.truncf %98 : vector<8x128xf32> to vector<8x128xbf16>
    %cst_26 = arith.constant dense<0.000000e+00> : vector<8x512xf32>
    %103 = tpu.matmul %102, %3, %cst_26 {dimension_numbers = #tpu.dot_dimension_numbers<[1], [0], [0], [1], [0, 0, 1, 1], [], []>} : vector<8x128xbf16>, vector<128x512xbf16>, vector<8x512xf32> -> vector<8x512xf32>
    %104 = arith.addf %101, %103 : vector<8x512xf32>
    %105 = vector.extract_strided_slice %104 {offsets = [0, 0], sizes = [8, 128], strides = [1, 1]} : vector<8x512xf32> to vector<8x128xf32>
    %106 = arith.negf %105 : vector<8x128xf32>
    %107 = math.exp %106 : vector<8x128xf32>
    %cst_27 = arith.constant 1.000000e+00 : f32
    %108 = vector.broadcast %cst_27 : f32 to vector<8x128xf32>
    %109 = arith.addf %108, %107 : vector<8x128xf32>
    %110 = arith.divf %108, %109 : vector<8x128xf32>
    %111 = vector.extract_strided_slice %104 {offsets = [0, 128], sizes = [8, 128], strides = [1, 1]} : vector<8x512xf32> to vector<8x128xf32>
    %112 = arith.negf %111 : vector<8x128xf32>
    %113 = math.exp %112 : vector<8x128xf32>
    %cst_28 = arith.constant 1.000000e+00 : f32
    %114 = vector.broadcast %cst_28 : f32 to vector<8x128xf32>
    %115 = arith.addf %114, %113 : vector<8x128xf32>
    %116 = arith.divf %114, %115 : vector<8x128xf32>
    %117 = vector.extract_strided_slice %104 {offsets = [0, 256], sizes = [8, 128], strides = [1, 1]} : vector<8x512xf32> to vector<8x128xf32>
    %118 = math.tanh %117 : vector<8x128xf32>
    %119 = vector.extract_strided_slice %104 {offsets = [0, 384], sizes = [8, 128], strides = [1, 1]} : vector<8x512xf32> to vector<8x128xf32>
    %120 = arith.negf %119 : vector<8x128xf32>
    %121 = math.exp %120 : vector<8x128xf32>
    %cst_29 = arith.constant 1.000000e+00 : f32
    %122 = vector.broadcast %cst_29 : f32 to vector<8x128xf32>
    %123 = arith.addf %122, %121 : vector<8x128xf32>
    %124 = arith.divf %122, %123 : vector<8x128xf32>
    %125 = arith.mulf %116, %96 : vector<8x128xf32>
    %126 = arith.mulf %110, %118 : vector<8x128xf32>
    %127 = arith.addf %125, %126 : vector<8x128xf32>
    %128 = math.tanh %127 : vector<8x128xf32>
    %129 = arith.mulf %124, %128 : vector<8x128xf32>
    %c4_i32 = arith.constant 4 : i32
    %130 = arith.index_cast %c4_i32 : i32 to index
    %c0_30 = arith.constant 0 : index
    %c0_31 = arith.constant 0 : index
    %131 = vector.load %arg2[%130, %c0_30, %c0_31] : memref<8x8x512xf32, #tpu.memory_space<vmem>>, vector<1x8x512xf32>
    %132 = vector.shape_cast %131 : vector<1x8x512xf32> to vector<8x512xf32>
    %133 = arith.truncf %129 : vector<8x128xf32> to vector<8x128xbf16>
    %cst_32 = arith.constant dense<0.000000e+00> : vector<8x512xf32>
    %134 = tpu.matmul %133, %3, %cst_32 {dimension_numbers = #tpu.dot_dimension_numbers<[1], [0], [0], [1], [0, 0, 1, 1], [], []>} : vector<8x128xbf16>, vector<128x512xbf16>, vector<8x512xf32> -> vector<8x512xf32>
    %135 = arith.addf %132, %134 : vector<8x512xf32>
    %136 = vector.extract_strided_slice %135 {offsets = [0, 0], sizes = [8, 128], strides = [1, 1]} : vector<8x512xf32> to vector<8x128xf32>
    %137 = arith.negf %136 : vector<8x128xf32>
    %138 = math.exp %137 : vector<8x128xf32>
    %cst_33 = arith.constant 1.000000e+00 : f32
    %139 = vector.broadcast %cst_33 : f32 to vector<8x128xf32>
    %140 = arith.addf %139, %138 : vector<8x128xf32>
    %141 = arith.divf %139, %140 : vector<8x128xf32>
    %142 = vector.extract_strided_slice %135 {offsets = [0, 128], sizes = [8, 128], strides = [1, 1]} : vector<8x512xf32> to vector<8x128xf32>
    %143 = arith.negf %142 : vector<8x128xf32>
    %144 = math.exp %143 : vector<8x128xf32>
    %cst_34 = arith.constant 1.000000e+00 : f32
    %145 = vector.broadcast %cst_34 : f32 to vector<8x128xf32>
    %146 = arith.addf %145, %144 : vector<8x128xf32>
    %147 = arith.divf %145, %146 : vector<8x128xf32>
    %148 = vector.extract_strided_slice %135 {offsets = [0, 256], sizes = [8, 128], strides = [1, 1]} : vector<8x512xf32> to vector<8x128xf32>
    %149 = math.tanh %148 : vector<8x128xf32>
    %150 = vector.extract_strided_slice %135 {offsets = [0, 384], sizes = [8, 128], strides = [1, 1]} : vector<8x512xf32> to vector<8x128xf32>
    %151 = arith.negf %150 : vector<8x128xf32>
    %152 = math.exp %151 : vector<8x128xf32>
    %cst_35 = arith.constant 1.000000e+00 : f32
    %153 = vector.broadcast %cst_35 : f32 to vector<8x128xf32>
    %154 = arith.addf %153, %152 : vector<8x128xf32>
    %155 = arith.divf %153, %154 : vector<8x128xf32>
    %156 = arith.mulf %147, %127 : vector<8x128xf32>
    %157 = arith.mulf %141, %149 : vector<8x128xf32>
    %158 = arith.addf %156, %157 : vector<8x128xf32>
    %159 = math.tanh %158 : vector<8x128xf32>
    %160 = arith.mulf %155, %159 : vector<8x128xf32>
    %c5_i32 = arith.constant 5 : i32
    %161 = arith.index_cast %c5_i32 : i32 to index
    %c0_36 = arith.constant 0 : index
    %c0_37 = arith.constant 0 : index
    %162 = vector.load %arg2[%161, %c0_36, %c0_37] : memref<8x8x512xf32, #tpu.memory_space<vmem>>, vector<1x8x512xf32>
    %163 = vector.shape_cast %162 : vector<1x8x512xf32> to vector<8x512xf32>
    %164 = arith.truncf %160 : vector<8x128xf32> to vector<8x128xbf16>
    %cst_38 = arith.constant dense<0.000000e+00> : vector<8x512xf32>
    %165 = tpu.matmul %164, %3, %cst_38 {dimension_numbers = #tpu.dot_dimension_numbers<[1], [0], [0], [1], [0, 0, 1, 1], [], []>} : vector<8x128xbf16>, vector<128x512xbf16>, vector<8x512xf32> -> vector<8x512xf32>
    %166 = arith.addf %163, %165 : vector<8x512xf32>
    %167 = vector.extract_strided_slice %166 {offsets = [0, 0], sizes = [8, 128], strides = [1, 1]} : vector<8x512xf32> to vector<8x128xf32>
    %168 = arith.negf %167 : vector<8x128xf32>
    %169 = math.exp %168 : vector<8x128xf32>
    %cst_39 = arith.constant 1.000000e+00 : f32
    %170 = vector.broadcast %cst_39 : f32 to vector<8x128xf32>
    %171 = arith.addf %170, %169 : vector<8x128xf32>
    %172 = arith.divf %170, %171 : vector<8x128xf32>
    %173 = vector.extract_strided_slice %166 {offsets = [0, 128], sizes = [8, 128], strides = [1, 1]} : vector<8x512xf32> to vector<8x128xf32>
    %174 = arith.negf %173 : vector<8x128xf32>
    %175 = math.exp %174 : vector<8x128xf32>
    %cst_40 = arith.constant 1.000000e+00 : f32
    %176 = vector.broadcast %cst_40 : f32 to vector<8x128xf32>
    %177 = arith.addf %176, %175 : vector<8x128xf32>
    %178 = arith.divf %176, %177 : vector<8x128xf32>
    %179 = vector.extract_strided_slice %166 {offsets = [0, 256], sizes = [8, 128], strides = [1, 1]} : vector<8x512xf32> to vector<8x128xf32>
    %180 = math.tanh %179 : vector<8x128xf32>
    %181 = vector.extract_strided_slice %166 {offsets = [0, 384], sizes = [8, 128], strides = [1, 1]} : vector<8x512xf32> to vector<8x128xf32>
    %182 = arith.negf %181 : vector<8x128xf32>
    %183 = math.exp %182 : vector<8x128xf32>
    %cst_41 = arith.constant 1.000000e+00 : f32
    %184 = vector.broadcast %cst_41 : f32 to vector<8x128xf32>
    %185 = arith.addf %184, %183 : vector<8x128xf32>
    %186 = arith.divf %184, %185 : vector<8x128xf32>
    %187 = arith.mulf %178, %158 : vector<8x128xf32>
    %188 = arith.mulf %172, %180 : vector<8x128xf32>
    %189 = arith.addf %187, %188 : vector<8x128xf32>
    %190 = math.tanh %189 : vector<8x128xf32>
    %191 = arith.mulf %186, %190 : vector<8x128xf32>
    %c6_i32 = arith.constant 6 : i32
    %192 = arith.index_cast %c6_i32 : i32 to index
    %c0_42 = arith.constant 0 : index
    %c0_43 = arith.constant 0 : index
    %193 = vector.load %arg2[%192, %c0_42, %c0_43] : memref<8x8x512xf32, #tpu.memory_space<vmem>>, vector<1x8x512xf32>
    %194 = vector.shape_cast %193 : vector<1x8x512xf32> to vector<8x512xf32>
    %195 = arith.truncf %191 : vector<8x128xf32> to vector<8x128xbf16>
    %cst_44 = arith.constant dense<0.000000e+00> : vector<8x512xf32>
    %196 = tpu.matmul %195, %3, %cst_44 {dimension_numbers = #tpu.dot_dimension_numbers<[1], [0], [0], [1], [0, 0, 1, 1], [], []>} : vector<8x128xbf16>, vector<128x512xbf16>, vector<8x512xf32> -> vector<8x512xf32>
    %197 = arith.addf %194, %196 : vector<8x512xf32>
    %198 = vector.extract_strided_slice %197 {offsets = [0, 0], sizes = [8, 128], strides = [1, 1]} : vector<8x512xf32> to vector<8x128xf32>
    %199 = arith.negf %198 : vector<8x128xf32>
    %200 = math.exp %199 : vector<8x128xf32>
    %cst_45 = arith.constant 1.000000e+00 : f32
    %201 = vector.broadcast %cst_45 : f32 to vector<8x128xf32>
    %202 = arith.addf %201, %200 : vector<8x128xf32>
    %203 = arith.divf %201, %202 : vector<8x128xf32>
    %204 = vector.extract_strided_slice %197 {offsets = [0, 128], sizes = [8, 128], strides = [1, 1]} : vector<8x512xf32> to vector<8x128xf32>
    %205 = arith.negf %204 : vector<8x128xf32>
    %206 = math.exp %205 : vector<8x128xf32>
    %cst_46 = arith.constant 1.000000e+00 : f32
    %207 = vector.broadcast %cst_46 : f32 to vector<8x128xf32>
    %208 = arith.addf %207, %206 : vector<8x128xf32>
    %209 = arith.divf %207, %208 : vector<8x128xf32>
    %210 = vector.extract_strided_slice %197 {offsets = [0, 256], sizes = [8, 128], strides = [1, 1]} : vector<8x512xf32> to vector<8x128xf32>
    %211 = math.tanh %210 : vector<8x128xf32>
    %212 = vector.extract_strided_slice %197 {offsets = [0, 384], sizes = [8, 128], strides = [1, 1]} : vector<8x512xf32> to vector<8x128xf32>
    %213 = arith.negf %212 : vector<8x128xf32>
    %214 = math.exp %213 : vector<8x128xf32>
    %cst_47 = arith.constant 1.000000e+00 : f32
    %215 = vector.broadcast %cst_47 : f32 to vector<8x128xf32>
    %216 = arith.addf %215, %214 : vector<8x128xf32>
    %217 = arith.divf %215, %216 : vector<8x128xf32>
    %218 = arith.mulf %209, %189 : vector<8x128xf32>
    %219 = arith.mulf %203, %211 : vector<8x128xf32>
    %220 = arith.addf %218, %219 : vector<8x128xf32>
    %221 = math.tanh %220 : vector<8x128xf32>
    %222 = arith.mulf %217, %221 : vector<8x128xf32>
    %c7_i32 = arith.constant 7 : i32
    %223 = arith.index_cast %c7_i32 : i32 to index
    %c0_48 = arith.constant 0 : index
    %c0_49 = arith.constant 0 : index
    %224 = vector.load %arg2[%223, %c0_48, %c0_49] : memref<8x8x512xf32, #tpu.memory_space<vmem>>, vector<1x8x512xf32>
    %225 = vector.shape_cast %224 : vector<1x8x512xf32> to vector<8x512xf32>
    %226 = arith.truncf %222 : vector<8x128xf32> to vector<8x128xbf16>
    %cst_50 = arith.constant dense<0.000000e+00> : vector<8x512xf32>
    %227 = tpu.matmul %226, %3, %cst_50 {dimension_numbers = #tpu.dot_dimension_numbers<[1], [0], [0], [1], [0, 0, 1, 1], [], []>} : vector<8x128xbf16>, vector<128x512xbf16>, vector<8x512xf32> -> vector<8x512xf32>
    %228 = arith.addf %225, %227 : vector<8x512xf32>
    %229 = vector.extract_strided_slice %228 {offsets = [0, 0], sizes = [8, 128], strides = [1, 1]} : vector<8x512xf32> to vector<8x128xf32>
    %230 = arith.negf %229 : vector<8x128xf32>
    %231 = math.exp %230 : vector<8x128xf32>
    %cst_51 = arith.constant 1.000000e+00 : f32
    %232 = vector.broadcast %cst_51 : f32 to vector<8x128xf32>
    %233 = arith.addf %232, %231 : vector<8x128xf32>
    %234 = arith.divf %232, %233 : vector<8x128xf32>
    %235 = vector.extract_strided_slice %228 {offsets = [0, 128], sizes = [8, 128], strides = [1, 1]} : vector<8x512xf32> to vector<8x128xf32>
    %236 = arith.negf %235 : vector<8x128xf32>
    %237 = math.exp %236 : vector<8x128xf32>
    %cst_52 = arith.constant 1.000000e+00 : f32
    %238 = vector.broadcast %cst_52 : f32 to vector<8x128xf32>
    %239 = arith.addf %238, %237 : vector<8x128xf32>
    %240 = arith.divf %238, %239 : vector<8x128xf32>
    %241 = vector.extract_strided_slice %228 {offsets = [0, 256], sizes = [8, 128], strides = [1, 1]} : vector<8x512xf32> to vector<8x128xf32>
    %242 = math.tanh %241 : vector<8x128xf32>
    %243 = vector.extract_strided_slice %228 {offsets = [0, 384], sizes = [8, 128], strides = [1, 1]} : vector<8x512xf32> to vector<8x128xf32>
    %244 = arith.negf %243 : vector<8x128xf32>
    %245 = math.exp %244 : vector<8x128xf32>
    %cst_53 = arith.constant 1.000000e+00 : f32
    %246 = vector.broadcast %cst_53 : f32 to vector<8x128xf32>
    %247 = arith.addf %246, %245 : vector<8x128xf32>
    %248 = arith.divf %246, %247 : vector<8x128xf32>
    %249 = arith.mulf %240, %220 : vector<8x128xf32>
    %250 = arith.mulf %234, %242 : vector<8x128xf32>
    %251 = arith.addf %249, %250 : vector<8x128xf32>
    %252 = math.tanh %251 : vector<8x128xf32>
    %253 = arith.mulf %248, %252 : vector<8x128xf32>
    %c8_i32 = arith.constant 8 : i32
    %c0_54 = arith.constant 0 : index
    %c0_55 = arith.constant 0 : index
    %254 = vector.load %arg5[%c0_54, %c0_55] : memref<8x128xf32, #tpu.memory_space<vmem>>, vector<8x128xf32>
    tpu.vector_store %arg5[%c0_54, %c0_55], %253 {strides = array<i32>} : memref<8x128xf32, #tpu.memory_space<vmem>>, vector<8x128xf32>,
    %c0_56 = arith.constant 0 : index
    %c0_57 = arith.constant 0 : index
    %255 = vector.load %arg6[%c0_56, %c0_57] : memref<8x128xf32, #tpu.memory_space<vmem>>, vector<8x128xf32>
    tpu.vector_store %arg6[%c0_56, %c0_57], %251 {strides = array<i32>} : memref<8x128xf32, #tpu.memory_space<vmem>>, vector<8x128xf32>,
    %c0_i32_58 = arith.constant 0 : i32
    %256 = arith.cmpi eq, %arg1, %c0_i32_58 : i32
    %257 = arith.extui %256 : i1 to i32
    %c0_i32_59 = arith.constant 0 : i32
    %258 = arith.cmpi ne, %257, %c0_i32_59 : i32
    scf.if %258 {
      %c0_60 = arith.constant 0 : index
      %c0_61 = arith.constant 0 : index
      %259 = vector.load %arg4[%c0_60, %c0_61] : memref<8x128xf32, #tpu.memory_space<vmem>>, vector<8x128xf32>
      tpu.vector_store %arg4[%c0_60, %c0_61], %253 {strides = array<i32>} : memref<8x128xf32, #tpu.memory_space<vmem>>, vector<8x128xf32>,
    } else {
    }
    return
  }
  func.func @transform_0(%arg0: i32, %arg1: i32) -> (i32, i32, i32) {
    %c0_i32 = arith.constant 0 : i32
    %c0_i32_0 = arith.constant 0 : i32
    return %arg1, %arg0, %c0_i32 : i32, i32, i32
  }
  func.func @transform_1(%arg0: i32, %arg1: i32) -> (i32, i32) {
    %c0_i32 = arith.constant 0 : i32
    %c0_i32_0 = arith.constant 0 : i32
    %c0_i32_1 = arith.constant 0 : i32
    return %c0_i32, %c0_i32_0 : i32, i32
  }
  func.func @transform_2(%arg0: i32, %arg1: i32) -> (i32, i32) {
    %c0_i32 = arith.constant 0 : i32
    %c0_i32_0 = arith.constant 0 : i32
    return %arg0, %c0_i32 : i32, i32
  }
}

</mosaic_0001>

<llo_original>
// kernel: tpu_custom_call.1
$region0: #{tpu_custom_call.1}
  #allocation0 [shape = 'u32[]', space=smem, size = 0x4, offset = 0x4, fixed_abs, tag = 'smem constant byte address 0x4 - core index']
  #allocation1 [shape = 'u32[72,128]{1,0:T(1,128)}', space=vmem, size = 0x9000, scoped, tag = 'internal scratch']
  #allocation2 [shape = 'f32[8,128]{1,0:T(8,128)}', space=vmem, size = 0x1000, scoped, tag = 'scratch operand']
  #allocation3 [shape = 'f32[8,128]{1,0:T(8,128)}', space=vmem, size = 0x1000, scoped, tag = 'scratch operand']
  %s0 = inlined_call_operand.hbm [shape: f32[8,8,512], index: 0, kind: input, shape index: {}]
  %s1 = inlined_call_operand.hbm [shape: bf16[128,512], index: 1, kind: input, shape index: {}]
  %s2 = inlined_call_operand.hbm [shape: f32[8,128], index: 2, kind: output, shape index: {}]
  %s3 = sld [smem:[#allocation0]]
  $region34: #{tpu_custom_call.1} parent=0
    _
  %s5 = ssub.s32 1, %s3
  %s6 = scalar_select 0, %s5, %s3
  $region1: #{tpu_custom_call.1} parent=0
    #allocation4 [shape = 'u8[131072]{0}', space=vmem, size = 0x20000, scoped, tag = 'input window, operand 0, single buffered']
    #allocation5 [shape = 's32[1]{0}', space=sflag, size = 0x4, scoped, tag = 'scoped memory for tpu_custom_call.1']
    #allocation6 [shape = 's32[1]{0}', space=sflag, size = 0x4, scoped, tag = 'scoped memory for tpu_custom_call.1']
    #allocation7 [shape = 'u8[131072]{0}', space=vmem, size = 0x20000, scoped, tag = 'input window, operand 1, single buffered']
    #allocation8 [shape = 's32[1]{0}', space=sflag, size = 0x4, scoped, tag = 'scoped memory for tpu_custom_call.1']
    #allocation9 [shape = 'u8[4096]{0}', space=vmem, size = 0x1000, scoped, tag = 'output window, operand 0, single buffered']
    %7 = vsyncpa [#allocation5], 0
    %8 = vsyncpa [#allocation8], 0
    %9 = vsyncpa [#allocation6], 0
    // Predicated region
    $region2: #{tpu_custom_call.1} parent=1 // pred_check
      _
    $region3: #{tpu_custom_call.1} parent=1 // pred_check_branch
      %11 = sbr.rel (0) target = $region5
    $region4: #{tpu_custom_call.1} parent=1 // pred_region
      %13 = vsyncadd [#allocation5], 0
      %s14 = sshll.u32 %s0, 4
      %s15 = int_to_ptr.hbm [resolvable:$true] %s14
      %s16 = sshll.u32 [#allocation4], 4
      %s17 = int_to_ptr.vmem [resolvable:$true] %s16
      %22 = dma.hbm_to_vmem [thread:$0]  %s15, 4096, %s17, [#allocation5], 512, 512, 32
    $region5: #{tpu_custom_call.1} parent=1 // pred_fallthru
      _
    // Predicated region
    $region6: #{tpu_custom_call.1} parent=1 // pred_check
      _
    $region7: #{tpu_custom_call.1} parent=1 // pred_check_branch
      %24 = sbr.rel (0) target = $region9
    $region8: #{tpu_custom_call.1} parent=1 // pred_region
      %26 = vsyncadd [#allocation8], 0
      %s27 = sshll.u32 %s1, 4
      %s28 = int_to_ptr.hbm [resolvable:$true] %s27
      %s29 = sshll.u32 [#allocation7], 4
      %s30 = int_to_ptr.vmem [resolvable:$true] %s29
      %35 = dma.hbm_to_vmem [thread:$0]  %s28, 4096, %s30, [#allocation8], 256, 256, 16
    $region9: #{tpu_custom_call.1} parent=1 // pred_fallthru
      _
    // Predicated region
    $region10: #{tpu_custom_call.1} parent=1 // pred_check
      _
    $region11: #{tpu_custom_call.1} parent=1 // pred_check_branch
      %37 = sbr.rel (0) target = $region13
    $region12: #{tpu_custom_call.1} parent=1 // pred_region
      %39 = dma.done [#allocation5], 4096
    $region13: #{tpu_custom_call.1} parent=1 // pred_fallthru
      _
    // Predicated region
    $region14: #{tpu_custom_call.1} parent=1 // pred_check
      _
    $region15: #{tpu_custom_call.1} parent=1 // pred_check_branch
      %41 = sbr.rel (0) target = $region17
    $region16: #{tpu_custom_call.1} parent=1 // pred_region
      %43 = dma.done [#allocation8], 4096
    $region17: #{tpu_custom_call.1} parent=1 // pred_fallthru
      _
    %p44 = scmp.eq.s32.totalorder 0, 0
    // Predicated region
    $region18: #{tpu_custom_call.1} parent=1 // pred_check
      %p45 = pneg %p44
    $region19: #{tpu_custom_call.1} parent=1 // pred_check_branch
      %47 = sbr.rel (%p45) target = $region21
    $region20: #{tpu_custom_call.1} parent=1 // pred_region
      %48 = vst [vmem:[#allocation2] sm:$0xff] 0.0
      %49 = vst [vmem:[#allocation3] sm:$0xff] 0.0
    $region21: #{tpu_custom_call.1} parent=1 // pred_fallthru
      _
    %v50 = vld [vmem:[#allocation7] sm:$0xff]
    %v51 = vld [vmem:[#allocation7 + $0x8] sm:$0xff]
    %v52 = vld [vmem:[#allocation7 + $0x10] sm:$0xff]
    %v53 = vld [vmem:[#allocation7 + $0x18] sm:$0xff]
    %v54 = vld [vmem:[#allocation7 + $0x20] sm:$0xff]
    %v55 = vld [vmem:[#allocation7 + $0x28] sm:$0xff]
    %v56 = vld [vmem:[#allocation7 + $0x30] sm:$0xff]
    %v57 = vld [vmem:[#allocation7 + $0x38] sm:$0xff]
    %v58 = vld [vmem:[#allocation7 + $0x40] sm:$0xff]
    %v59 = vld [vmem:[#allocation7 + $0x48] sm:$0xff]
    %v60 = vld [vmem:[#allocation7 + $0x50] sm:$0xff]
    %v61 = vld [vmem:[#allocation7 + $0x58] sm:$0xff]
    %v62 = vld [vmem:[#allocation7 + $0x60] sm:$0xff]
    %v63 = vld [vmem:[#allocation7 + $0x68] sm:$0xff]
    %v64 = vld [vmem:[#allocation7 + $0x70] sm:$0xff]
    %v65 = vld [vmem:[#allocation7 + $0x78] sm:$0xff]
    %v66 = vld [vmem:[#allocation7 + $0x80] sm:$0xff]
    %v67 = vld [vmem:[#allocation7 + $0x88] sm:$0xff]
    %v68 = vld [vmem:[#allocation7 + $0x90] sm:$0xff]
    %v69 = vld [vmem:[#allocation7 + $0x98] sm:$0xff]
    %v70 = vld [vmem:[#allocation7 + $0xa0] sm:$0xff]
    %v71 = vld [vmem:[#allocation7 + $0xa8] sm:$0xff]
    %v72 = vld [vmem:[#allocation7 + $0xb0] sm:$0xff]
    %v73 = vld [vmem:[#allocation7 + $0xb8] sm:$0xff]
    %v74 = vld [vmem:[#allocation7 + $0xc0] sm:$0xff]
    %v75 = vld [vmem:[#allocation7 + $0xc8] sm:$0xff]
    %v76 = vld [vmem:[#allocation7 + $0xd0] sm:$0xff]
    %v77 = vld [vmem:[#allocation7 + $0xd8] sm:$0xff]
    %v78 = vld [vmem:[#allocation7 + $0xe0] sm:$0xff]
    %v79 = vld [vmem:[#allocation7 + $0xe8] sm:$0xff]
    %v80 = vld [vmem:[#allocation7 + $0xf0] sm:$0xff]
    %v81 = vld [vmem:[#allocation7 + $0xf8] sm:$0xff]
    %v82 = vld [vmem:[#allocation2] sm:$0xff]
    %v83 = vld [vmem:[#allocation3] sm:$0xff]
    %v84 = vld [vmem:[#allocation4] sm:$0xff]
    %v85 = vld [vmem:[#allocation4 + $0x8] sm:$0xff]
    %v86 = vld [vmem:[#allocation4 + $0x10] sm:$0xff]
    %v87 = vld [vmem:[#allocation4 + $0x18] sm:$0xff]
    %v88 = vpack.c.bf16 %v82, %v82
    %v121 = vunpack.c.l.b16 %v50
    %v122 = vunpack.c.h.b16 %v50
    %v123 = vunpack.c.l.b16 %v51
    %v124 = vunpack.c.h.b16 %v51
    %v125 = vunpack.c.l.b16 %v52
    %v126 = vunpack.c.h.b16 %v52
    %v127 = vunpack.c.l.b16 %v53
    %v128 = vunpack.c.h.b16 %v53
    %v129 = vunpack.c.l.b16 %v54
    %v130 = vunpack.c.h.b16 %v54
    %v131 = vunpack.c.l.b16 %v55
    %v132 = vunpack.c.h.b16 %v55
    %v133 = vunpack.c.l.b16 %v56
    %v134 = vunpack.c.h.b16 %v56
    %v135 = vunpack.c.l.b16 %v57
    %v136 = vunpack.c.h.b16 %v57
    %v137 = vunpack.c.l.b16 %v58
    %v138 = vunpack.c.h.b16 %v58
    %v139 = vunpack.c.l.b16 %v59
    %v140 = vunpack.c.h.b16 %v59
    %v141 = vunpack.c.l.b16 %v60
    %v142 = vunpack.c.h.b16 %v60
    %v143 = vunpack.c.l.b16 %v61
    %v144 = vunpack.c.h.b16 %v61
    %v145 = vunpack.c.l.b16 %v62
    %v146 = vunpack.c.h.b16 %v62
    %v147 = vunpack.c.l.b16 %v63
    %v148 = vunpack.c.h.b16 %v63
    %v149 = vunpack.c.l.b16 %v64
    %v150 = vunpack.c.h.b16 %v64
    %v151 = vunpack.c.l.b16 %v65
    %v152 = vunpack.c.h.b16 %v65
    %v153 = vunpack.c.l.b16 %v66
    %v154 = vunpack.c.h.b16 %v66
    %v155 = vunpack.c.l.b16 %v67
    %v156 = vunpack.c.h.b16 %v67
    %v157 = vunpack.c.l.b16 %v68
    %v158 = vunpack.c.h.b16 %v68
    %v159 = vunpack.c.l.b16 %v69
    %v160 = vunpack.c.h.b16 %v69
    %v161 = vunpack.c.l.b16 %v70
    %v162 = vunpack.c.h.b16 %v70
    %v163 = vunpack.c.l.b16 %v71
    %v164 = vunpack.c.h.b16 %v71
    %v165 = vunpack.c.l.b16 %v72
    %v166 = vunpack.c.h.b16 %v72
    %v167 = vunpack.c.l.b16 %v73
    %v168 = vunpack.c.h.b16 %v73
    %v169 = vunpack.c.l.b16 %v74
    %v170 = vunpack.c.h.b16 %v74
    %v171 = vunpack.c.l.b16 %v75
    %v172 = vunpack.c.h.b16 %v75
    %v173 = vunpack.c.l.b16 %v76
    %v174 = vunpack.c.h.b16 %v76
    %v175 = vunpack.c.l.b16 %v77
    %v176 = vunpack.c.h.b16 %v77
    %v177 = vunpack.c.l.b16 %v78
    %v178 = vunpack.c.h.b16 %v78
    %v179 = vunpack.c.l.b16 %v79
    %v180 = vunpack.c.h.b16 %v79
    %v181 = vunpack.c.l.b16 %v80
    %v182 = vunpack.c.h.b16 %v80
    %v183 = vunpack.c.l.b16 %v81
    %v184 = vunpack.c.h.b16 %v81
    %v185 = vpack.c.b16 %v125, %v121
    %v186 = vpack.c.b16 %v126, %v122
    %v187 = vpack.c.b16 %v127, %v123
    %v188 = vpack.c.b16 %v128, %v124
    %v189 = vpack.c.b16 %v133, %v129
    %v190 = vpack.c.b16 %v134, %v130
    %v191 = vpack.c.b16 %v135, %v131
    %v192 = vpack.c.b16 %v136, %v132
    %v193 = vpack.c.b16 %v141, %v137
    %v194 = vpack.c.b16 %v142, %v138
    %v195 = vpack.c.b16 %v143, %v139
    %v196 = vpack.c.b16 %v144, %v140
    %v197 = vpack.c.b16 %v149, %v145
    %v198 = vpack.c.b16 %v150, %v146
    %v199 = vpack.c.b16 %v151, %v147
    %v200 = vpack.c.b16 %v152, %v148
    %v201 = vpack.c.b16 %v157, %v153
    %v202 = vpack.c.b16 %v158, %v154
    %v203 = vpack.c.b16 %v159, %v155
    %v204 = vpack.c.b16 %v160, %v156
    %v205 = vpack.c.b16 %v165, %v161
    %v206 = vpack.c.b16 %v166, %v162
    %v207 = vpack.c.b16 %v167, %v163
    %v208 = vpack.c.b16 %v168, %v164
    %v209 = vpack.c.b16 %v173, %v169
    %v210 = vpack.c.b16 %v174, %v170
    %v211 = vpack.c.b16 %v175, %v171
    %v212 = vpack.c.b16 %v176, %v172
    %v213 = vpack.c.b16 %v181, %v177
    %v214 = vpack.c.b16 %v182, %v178
    %v215 = vpack.c.b16 %v183, %v179
    %v216 = vpack.c.b16 %v184, %v180
    %249 = vmatpush.bf16.msra.mxu0 %v213
    %250 = vmatpush.bf16.msra.mxu0 %v209
    %251 = vmatpush.bf16.msra.mxu0 %v205
    %252 = vmatpush.bf16.msra.mxu0 %v201
    %253 = vmatpush.bf16.msra.mxu0 %v197
    %254 = vmatpush.bf16.msra.mxu0 %v193
    %255 = vmatpush.bf16.msra.mxu0 %v189
    %256 = vmatpush.bf16.msra.mxu0 %v185
    %257 = vmatmul.bf16.gmra.mxu0 %v88
    %v258 = vpop.f32.mrf.mxu0
    %v259 = vadd.f32 0.0, %v258
    %v260 = vpop.f32.mrf.mxu0
    %261 = vdwg.mxu0
    %262 = vmatpush.bf16.msra.mxu0 %v214
    %263 = vmatpush.bf16.msra.mxu0 %v210
    %264 = vmatpush.bf16.msra.mxu0 %v206
    %265 = vmatpush.bf16.msra.mxu0 %v202
    %266 = vmatpush.bf16.msra.mxu0 %v198
    %267 = vmatpush.bf16.msra.mxu0 %v194
    %268 = vmatpush.bf16.msra.mxu0 %v190
    %269 = vmatpush.bf16.msra.mxu0 %v186
    %270 = vmatmul.bf16.gmra.mxu0 %v88
    %v271 = vpop.f32.mrf.mxu0
    %v272 = vadd.f32 0.0, %v271
    %v273 = vpop.f32.mrf.mxu0
    %274 = vdwg.mxu0
    %275 = vmatpush.bf16.msra.mxu0 %v215
    %276 = vmatpush.bf16.msra.mxu0 %v211
    %277 = vmatpush.bf16.msra.mxu0 %v207
    %278 = vmatpush.bf16.msra.mxu0 %v203
    %279 = vmatpush.bf16.msra.mxu0 %v199
    %280 = vmatpush.bf16.msra.mxu0 %v195
    %281 = vmatpush.bf16.msra.mxu0 %v191
    %282 = vmatpush.bf16.msra.mxu0 %v187
    %283 = vmatmul.bf16.gmra.mxu0 %v88
    %v284 = vpop.f32.mrf.mxu0
    %v285 = vadd.f32 0.0, %v284
    %v286 = vpop.f32.mrf.mxu0
    %287 = vdwg.mxu0
    %288 = vmatpush.bf16.msra.mxu0 %v216
    %289 = vmatpush.bf16.msra.mxu0 %v212
    %290 = vmatpush.bf16.msra.mxu0 %v208
    %291 = vmatpush.bf16.msra.mxu0 %v204
    %292 = vmatpush.bf16.msra.mxu0 %v200
    %293 = vmatpush.bf16.msra.mxu0 %v196
    %294 = vmatpush.bf16.msra.mxu0 %v192
    %295 = vmatpush.bf16.msra.mxu0 %v188
    %296 = vmatmul.bf16.gmra.mxu0 %v88
    %v297 = vpop.f32.mrf.mxu0
    %v298 = vadd.f32 0.0, %v297
    %v299 = vpop.f32.mrf.mxu0
    %300 = vdwg.mxu0
    %v301 = vadd.f32 %v84, %v259
    %v302 = vadd.f32 %v85, %v272
    %v303 = vadd.f32 %v86, %v285
    %v304 = vadd.f32 %v87, %v298
    %v305 = vxor.u32 %v301, 2147483648
    %v306 = vmul.f32 %v305, 1.442695
    %v307 = vpow.pop %v306
    %v308 = vadd.f32 %v307, 1.0
    %v309 = vrcp.pop %v308
    %v310 = vmul.f32 %v308, %v309
    %v311 = vsub.f32 1.0, %v310
    %v312 = vmul.f32 %v309, %v311
    %v313 = vadd.f32 %v309, %v312
    %vm314 = vweird.f32 %v308
    %vm315 = vweird.f32 %v309
    %vm316 = vmor %vm314, %vm315
    %v317 = vsel %vm316, %v309, %v313
    %v318 = vand.u32 2147483647, %v308
    %vm319 = vcmp.eq.f32.partialorder %v318, 8.507059e+37
    %v320 = vand.u32 %v308, 2147483648
    %v321 = vor.u32 1.1754944e-38, %v320
    %v322 = vsel %vm319, %v321, %v317
    %v323 = vmul.f32 1.0, %v322
    %v324 = vxor.u32 %v302, 2147483648
    %v325 = vmul.f32 %v324, 1.442695
    %v326 = vpow.pop %v325
    %v327 = vadd.f32 %v326, 1.0
    %v328 = vrcp.pop %v327
    %v329 = vmul.f32 %v327, %v328
    %v330 = vsub.f32 1.0, %v329
    %v331 = vmul.f32 %v328, %v330
    %v332 = vadd.f32 %v328, %v331
    %vm333 = vweird.f32 %v327
    %vm334 = vweird.f32 %v328
    %vm335 = vmor %vm333, %vm334
    %v336 = vsel %vm335, %v328, %v332
    %v337 = vand.u32 2147483647, %v327
    %vm338 = vcmp.eq.f32.partialorder %v337, 8.507059e+37
    %v339 = vand.u32 %v327, 2147483648
    %v340 = vor.u32 1.1754944e-38, %v339
    %v341 = vsel %vm338, %v340, %v336
    %v342 = vmul.f32 1.0, %v341
    %v343 = vtanh.pop %v303
    %v344 = vxor.u32 %v304, 2147483648
    %v345 = vmul.f32 %v344, 1.442695
    %v346 = vpow.pop %v345
    %v347 = vadd.f32 %v346, 1.0
    %v348 = vrcp.pop %v347
    %v349 = vmul.f32 %v347, %v348
    %v350 = vsub.f32 1.0, %v349
    %v351 = vmul.f32 %v348, %v350
    %v352 = vadd.f32 %v348, %v351
    %vm353 = vweird.f32 %v347
    %vm354 = vweird.f32 %v348
    %vm355 = vmor %vm353, %vm354
    %v356 = vsel %vm355, %v348, %v352
    %v357 = vand.u32 2147483647, %v347
    %vm358 = vcmp.eq.f32.partialorder %v357, 8.507059e+37
    %v359 = vand.u32 %v347, 2147483648
    %v360 = vor.u32 1.1754944e-38, %v359
    %v361 = vsel %vm358, %v360, %v356
    %v362 = vmul.f32 1.0, %v361
    %v363 = vmul.f32 %v342, %v83
    %v364 = vmul.f32 %v323, %v343
    %v365 = vadd.f32 %v363, %v364
    %v366 = vtanh.pop %v365
    %v367 = vmul.f32 %v362, %v366
    %s368 = scalar_lea.vmem [#allocation4], 32
    %v369 = vld [vmem:[%s368] sm:$0xff]
    %v370 = vld [vmem:[%s368 + $0x8] sm:$0xff]
    %v371 = vld [vmem:[%s368 + $0x10] sm:$0xff]
    %v372 = vld [vmem:[%s368 + $0x18] sm:$0xff]
    %v373 = vpack.c.bf16 %v367, %v367
    %374 = vmatpush.bf16.msra.mxu0 %v213
    %375 = vmatpush.bf16.msra.mxu0 %v209
    %376 = vmatpush.bf16.msra.mxu0 %v205
    %377 = vmatpush.bf16.msra.mxu0 %v201
    %378 = vmatpush.bf16.msra.mxu0 %v197
    %379 = vmatpush.bf16.msra.mxu0 %v193
    %380 = vmatpush.bf16.msra.mxu0 %v189
    %381 = vmatpush.bf16.msra.mxu0 %v185
    %382 = vmatmul.bf16.gmra.mxu0 %v373
    %v383 = vpop.f32.mrf.mxu0
    %v384 = vadd.f32 0.0, %v383
    %v385 = vpop.f32.mrf.mxu0
    %386 = vdwg.mxu0
    %387 = vmatpush.bf16.msra.mxu0 %v214
    %388 = vmatpush.bf16.msra.mxu0 %v210
    %389 = vmatpush.bf16.msra.mxu0 %v206
    %390 = vmatpush.bf16.msra.mxu0 %v202
    %391 = vmatpush.bf16.msra.mxu0 %v198
    %392 = vmatpush.bf16.msra.mxu0 %v194
    %393 = vmatpush.bf16.msra.mxu0 %v190
    %394 = vmatpush.bf16.msra.mxu0 %v186
    %395 = vmatmul.bf16.gmra.mxu0 %v373
    %v396 = vpop.f32.mrf.mxu0
    %v397 = vadd.f32 0.0, %v396
    %v398 = vpop.f32.mrf.mxu0
    %399 = vdwg.mxu0
    %400 = vmatpush.bf16.msra.mxu0 %v215
    %401 = vmatpush.bf16.msra.mxu0 %v211
    %402 = vmatpush.bf16.msra.mxu0 %v207
    %403 = vmatpush.bf16.msra.mxu0 %v203
    %404 = vmatpush.bf16.msra.mxu0 %v199
    %405 = vmatpush.bf16.msra.mxu0 %v195
    %406 = vmatpush.bf16.msra.mxu0 %v191
    %407 = vmatpush.bf16.msra.mxu0 %v187
    %408 = vmatmul.bf16.gmra.mxu0 %v373
    %v409 = vpop.f32.mrf.mxu0
    %v410 = vadd.f32 0.0, %v409
    %v411 = vpop.f32.mrf.mxu0
    %412 = vdwg.mxu0
    %413 = vmatpush.bf16.msra.mxu0 %v216
    %414 = vmatpush.bf16.msra.mxu0 %v212
    %415 = vmatpush.bf16.msra.mxu0 %v208
    %416 = vmatpush.bf16.msra.mxu0 %v204
    %417 = vmatpush.bf16.msra.mxu0 %v200
    %418 = vmatpush.bf16.msra.mxu0 %v196
    %419 = vmatpush.bf16.msra.mxu0 %v192
    %420 = vmatpush.bf16.msra.mxu0 %v188
    %421 = vmatmul.bf16.gmra.mxu0 %v373
    %v422 = vpop.f32.mrf.mxu0
    %v423 = vadd.f32 0.0, %v422
    %v424 = vpop.f32.mrf.mxu0
    %425 = vdwg.mxu0
    %v426 = vadd.f32 %v369, %v384
    %v427 = vadd.f32 %v370, %v397
    %v428 = vadd.f32 %v371, %v410
    %v429 = vadd.f32 %v372, %v423
    %v430 = vxor.u32 %v426, 2147483648
    %v431 = vmul.f32 %v430, 1.442695
    %v432 = vpow.pop %v431
    %v433 = vadd.f32 %v432, 1.0
    %v434 = vrcp.pop %v433
    %v435 = vmul.f32 %v433, %v434
    %v436 = vsub.f32 1.0, %v435
    %v437 = vmul.f32 %v434, %v436
    %v438 = vadd.f32 %v434, %v437
    %vm439 = vweird.f32 %v433
    %vm440 = vweird.f32 %v434
    %vm441 = vmor %vm439, %vm440
    %v442 = vsel %vm441, %v434, %v438
    %v443 = vand.u32 2147483647, %v433
    %vm444 = vcmp.eq.f32.partialorder %v443, 8.507059e+37
    %v445 = vand.u32 %v433, 2147483648
    %v446 = vor.u32 1.1754944e-38, %v445
    %v447 = vsel %vm444, %v446, %v442
    %v448 = vmul.f32 1.0, %v447
    %v449 = vxor.u32 %v427, 2147483648
    %v450 = vmul.f32 %v449, 1.442695
    %v451 = vpow.pop %v450
    %v452 = vadd.f32 %v451, 1.0
    %v453 = vrcp.pop %v452
    %v454 = vmul.f32 %v452, %v453
    %v455 = vsub.f32 1.0, %v454
    %v456 = vmul.f32 %v453, %v455
    %v457 = vadd.f32 %v453, %v456
    %vm458 = vweird.f32 %v452
    %vm459 = vweird.f32 %v453
    %vm460 = vmor %vm458, %vm459
    %v461 = vsel %vm460, %v453, %v457
    %v462 = vand.u32 2147483647, %v452
    %vm463 = vcmp.eq.f32.partialorder %v462, 8.507059e+37
    %v464 = vand.u32 %v452, 2147483648
    %v465 = vor.u32 1.1754944e-38, %v464
    %v466 = vsel %vm463, %v465, %v461
    %v467 = vmul.f32 1.0, %v466
    %v468 = vtanh.pop %v428
    %v469 = vxor.u32 %v429, 2147483648
    %v470 = vmul.f32 %v469, 1.442695
    %v471 = vpow.pop %v470
    %v472 = vadd.f32 %v471, 1.0
    %v473 = vrcp.pop %v472
    %v474 = vmul.f32 %v472, %v473
    %v475 = vsub.f32 1.0, %v474
    %v476 = vmul.f32 %v473, %v475
    %v477 = vadd.f32 %v473, %v476
    %vm478 = vweird.f32 %v472
    %vm479 = vweird.f32 %v473
    %vm480 = vmor %vm478, %vm479
    %v481 = vsel %vm480, %v473, %v477
    %v482 = vand.u32 2147483647, %v472
    %vm483 = vcmp.eq.f32.partialorder %v482, 8.507059e+37
    %v484 = vand.u32 %v472, 2147483648
    %v485 = vor.u32 1.1754944e-38, %v484
    %v486 = vsel %vm483, %v485, %v481
    %v487 = vmul.f32 1.0, %v486
    %v488 = vmul.f32 %v467, %v365
    %v489 = vmul.f32 %v448, %v468
    %v490 = vadd.f32 %v488, %v489
    %v491 = vtanh.pop %v490
    %v492 = vmul.f32 %v487, %v491
    %s493 = scalar_lea.vmem [#allocation4], 64
    %v494 = vld [vmem:[%s493] sm:$0xff]
    %v495 = vld [vmem:[%s493 + $0x8] sm:$0xff]
    %v496 = vld [vmem:[%s493 + $0x10] sm:$0xff]
    %v497 = vld [vmem:[%s493 + $0x18] sm:$0xff]
    %v498 = vpack.c.bf16 %v492, %v492
    %499 = vmatpush.bf16.msra.mxu0 %v213
    %500 = vmatpush.bf16.msra.mxu0 %v209
    %501 = vmatpush.bf16.msra.mxu0 %v205
    %502 = vmatpush.bf16.msra.mxu0 %v201
    %503 = vmatpush.bf16.msra.mxu0 %v197
    %504 = vmatpush.bf16.msra.mxu0 %v193
    %505 = vmatpush.bf16.msra.mxu0 %v189
    %506 = vmatpush.bf16.msra.mxu0 %v185
    %507 = vmatmul.bf16.gmra.mxu0 %v498
    %v508 = vpop.f32.mrf.mxu0
    %v509 = vadd.f32 0.0, %v508
    %v510 = vpop.f32.mrf.mxu0
    %511 = vdwg.mxu0
    %512 = vmatpush.bf16.msra.mxu0 %v214
    %513 = vmatpush.bf16.msra.mxu0 %v210
    %514 = vmatpush.bf16.msra.mxu0 %v206
    %515 = vmatpush.bf16.msra.mxu0 %v202
    %516 = vmatpush.bf16.msra.mxu0 %v198
    %517 = vmatpush.bf16.msra.mxu0 %v194
    %518 = vmatpush.bf16.msra.mxu0 %v190
    %519 = vmatpush.bf16.msra.mxu0 %v186
    %520 = vmatmul.bf16.gmra.mxu0 %v498
    %v521 = vpop.f32.mrf.mxu0
    %v522 = vadd.f32 0.0, %v521
    %v523 = vpop.f32.mrf.mxu0
    %524 = vdwg.mxu0
    %525 = vmatpush.bf16.msra.mxu0 %v215
    %526 = vmatpush.bf16.msra.mxu0 %v211
    %527 = vmatpush.bf16.msra.mxu0 %v207
    %528 = vmatpush.bf16.msra.mxu0 %v203
    %529 = vmatpush.bf16.msra.mxu0 %v199
    %530 = vmatpush.bf16.msra.mxu0 %v195
    %531 = vmatpush.bf16.msra.mxu0 %v191
    %532 = vmatpush.bf16.msra.mxu0 %v187
    %533 = vmatmul.bf16.gmra.mxu0 %v498
    %v534 = vpop.f32.mrf.mxu0
    %v535 = vadd.f32 0.0, %v534
    %v536 = vpop.f32.mrf.mxu0
    %537 = vdwg.mxu0
    %538 = vmatpush.bf16.msra.mxu0 %v216
    %539 = vmatpush.bf16.msra.mxu0 %v212
    %540 = vmatpush.bf16.msra.mxu0 %v208
    %541 = vmatpush.bf16.msra.mxu0 %v204
    %542 = vmatpush.bf16.msra.mxu0 %v200
    %543 = vmatpush.bf16.msra.mxu0 %v196
    %544 = vmatpush.bf16.msra.mxu0 %v192
    %545 = vmatpush.bf16.msra.mxu0 %v188
    %546 = vmatmul.bf16.gmra.mxu0 %v498
    %v547 = vpop.f32.mrf.mxu0
    %v548 = vadd.f32 0.0, %v547
    %v549 = vpop.f32.mrf.mxu0
    %550 = vdwg.mxu0
    %v551 = vadd.f32 %v494, %v509
    %v552 = vadd.f32 %v495, %v522
    %v553 = vadd.f32 %v496, %v535
    %v554 = vadd.f32 %v497, %v548
    %v555 = vxor.u32 %v551, 2147483648
    %v556 = vmul.f32 %v555, 1.442695
    %v557 = vpow.pop %v556
    %v558 = vadd.f32 %v557, 1.0
    %v559 = vrcp.pop %v558
    %v560 = vmul.f32 %v558, %v559
    %v561 = vsub.f32 1.0, %v560
    %v562 = vmul.f32 %v559, %v561
    %v563 = vadd.f32 %v559, %v562
    %vm564 = vweird.f32 %v558
    %vm565 = vweird.f32 %v559
    %vm566 = vmor %vm564, %vm565
    %v567 = vsel %vm566, %v559, %v563
    %v568 = vand.u32 2147483647, %v558
    %vm569 = vcmp.eq.f32.partialorder %v568, 8.507059e+37
    %v570 = vand.u32 %v558, 2147483648
    %v571 = vor.u32 1.1754944e-38, %v570
    %v572 = vsel %vm569, %v571, %v567
    %v573 = vmul.f32 1.0, %v572
    %v574 = vxor.u32 %v552, 2147483648
    %v575 = vmul.f32 %v574, 1.442695
    %v576 = vpow.pop %v575
    %v577 = vadd.f32 %v576, 1.0
    %v578 = vrcp.pop %v577
    %v579 = vmul.f32 %v577, %v578
    %v580 = vsub.f32 1.0, %v579
    %v581 = vmul.f32 %v578, %v580
    %v582 = vadd.f32 %v578, %v581
    %vm583 = vweird.f32 %v577
    %vm584 = vweird.f32 %v578
    %vm585 = vmor %vm583, %vm584
    %v586 = vsel %vm585, %v578, %v582
    %v587 = vand.u32 2147483647, %v577
    %vm588 = vcmp.eq.f32.partialorder %v587, 8.507059e+37
    %v589 = vand.u32 %v577, 2147483648
    %v590 = vor.u32 1.1754944e-38, %v589
    %v591 = vsel %vm588, %v590, %v586
    %v592 = vmul.f32 1.0, %v591
    %v593 = vtanh.pop %v553
    %v594 = vxor.u32 %v554, 2147483648
    %v595 = vmul.f32 %v594, 1.442695
    %v596 = vpow.pop %v595
    %v597 = vadd.f32 %v596, 1.0
    %v598 = vrcp.pop %v597
    %v599 = vmul.f32 %v597, %v598
    %v600 = vsub.f32 1.0, %v599
    %v601 = vmul.f32 %v598, %v600
    %v602 = vadd.f32 %v598, %v601
    %vm603 = vweird.f32 %v597
    %vm604 = vweird.f32 %v598
    %vm605 = vmor %vm603, %vm604
    %v606 = vsel %vm605, %v598, %v602
    %v607 = vand.u32 2147483647, %v597
    %vm608 = vcmp.eq.f32.partialorder %v607, 8.507059e+37
    %v609 = vand.u32 %v597, 2147483648
    %v610 = vor.u32 1.1754944e-38, %v609
    %v611 = vsel %vm608, %v610, %v606
    %v612 = vmul.f32 1.0, %v611
    %v613 = vmul.f32 %v592, %v490
    %v614 = vmul.f32 %v573, %v593
    %v615 = vadd.f32 %v613, %v614
    %v616 = vtanh.pop %v615
    %v617 = vmul.f32 %v612, %v616
    %s618 = scalar_lea.vmem [#allocation4], 96
    %v619 = vld [vmem:[%s618] sm:$0xff]
    %v620 = vld [vmem:[%s618 + $0x8] sm:$0xff]
    %v621 = vld [vmem:[%s618 + $0x10] sm:$0xff]
    %v622 = vld [vmem:[%s618 + $0x18] sm:$0xff]
    %v623 = vpack.c.bf16 %v617, %v617
    %624 = vmatpush.bf16.msra.mxu0 %v213
    %625 = vmatpush.bf16.msra.mxu0 %v209
    %626 = vmatpush.bf16.msra.mxu0 %v205
    %627 = vmatpush.bf16.msra.mxu0 %v201
    %628 = vmatpush.bf16.msra.mxu0 %v197
    %629 = vmatpush.bf16.msra.mxu0 %v193
    %630 = vmatpush.bf16.msra.mxu0 %v189
    %631 = vmatpush.bf16.msra.mxu0 %v185
    %632 = vmatmul.bf16.gmra.mxu0 %v623
    %v633 = vpop.f32.mrf.mxu0
    %v634 = vadd.f32 0.0, %v633
    %v635 = vpop.f32.mrf.mxu0
    %636 = vdwg.mxu0
    %637 = vmatpush.bf16.msra.mxu0 %v214
    %638 = vmatpush.bf16.msra.mxu0 %v210
    %639 = vmatpush.bf16.msra.mxu0 %v206
    %640 = vmatpush.bf16.msra.mxu0 %v202
    %641 = vmatpush.bf16.msra.mxu0 %v198
    %642 = vmatpush.bf16.msra.mxu0 %v194
    %643 = vmatpush.bf16.msra.mxu0 %v190
    %644 = vmatpush.bf16.msra.mxu0 %v186
    %645 = vmatmul.bf16.gmra.mxu0 %v623
    %v646 = vpop.f32.mrf.mxu0
    %v647 = vadd.f32 0.0, %v646
    %v648 = vpop.f32.mrf.mxu0
    %649 = vdwg.mxu0
    %650 = vmatpush.bf16.msra.mxu0 %v215
    %651 = vmatpush.bf16.msra.mxu0 %v211
    %652 = vmatpush.bf16.msra.mxu0 %v207
    %653 = vmatpush.bf16.msra.mxu0 %v203
    %654 = vmatpush.bf16.msra.mxu0 %v199
    %655 = vmatpush.bf16.msra.mxu0 %v195
    %656 = vmatpush.bf16.msra.mxu0 %v191
    %657 = vmatpush.bf16.msra.mxu0 %v187
    %658 = vmatmul.bf16.gmra.mxu0 %v623
    %v659 = vpop.f32.mrf.mxu0
    %v660 = vadd.f32 0.0, %v659
    %v661 = vpop.f32.mrf.mxu0
    %662 = vdwg.mxu0
    %663 = vmatpush.bf16.msra.mxu0 %v216
    %664 = vmatpush.bf16.msra.mxu0 %v212
    %665 = vmatpush.bf16.msra.mxu0 %v208
    %666 = vmatpush.bf16.msra.mxu0 %v204
    %667 = vmatpush.bf16.msra.mxu0 %v200
    %668 = vmatpush.bf16.msra.mxu0 %v196
    %669 = vmatpush.bf16.msra.mxu0 %v192
    %670 = vmatpush.bf16.msra.mxu0 %v188
    %671 = vmatmul.bf16.gmra.mxu0 %v623
    %v672 = vpop.f32.mrf.mxu0
    %v673 = vadd.f32 0.0, %v672
    %v674 = vpop.f32.mrf.mxu0
    %675 = vdwg.mxu0
    %v676 = vadd.f32 %v619, %v634
    %v677 = vadd.f32 %v620, %v647
    %v678 = vadd.f32 %v621, %v660
    %v679 = vadd.f32 %v622, %v673
    %v680 = vxor.u32 %v676, 2147483648
    %v681 = vmul.f32 %v680, 1.442695
    %v682 = vpow.pop %v681
    %v683 = vadd.f32 %v682, 1.0
    %v684 = vrcp.pop %v683
    %v685 = vmul.f32 %v683, %v684
    %v686 = vsub.f32 1.0, %v685
    %v687 = vmul.f32 %v684, %v686
    %v688 = vadd.f32 %v684, %v687
    %vm689 = vweird.f32 %v683
    %vm690 = vweird.f32 %v684
    %vm691 = vmor %vm689, %vm690
    %v692 = vsel %vm691, %v684, %v688
    %v693 = vand.u32 2147483647, %v683
    %vm694 = vcmp.eq.f32.partialorder %v693, 8.507059e+37
    %v695 = vand.u32 %v683, 2147483648
    %v696 = vor.u32 1.1754944e-38, %v695
    %v697 = vsel %vm694, %v696, %v692
    %v698 = vmul.f32 1.0, %v697
    %v699 = vxor.u32 %v677, 2147483648
    %v700 = vmul.f32 %v699, 1.442695
    %v701 = vpow.pop %v700
    %v702 = vadd.f32 %v701, 1.0
    %v703 = vrcp.pop %v702
    %v704 = vmul.f32 %v702, %v703
    %v705 = vsub.f32 1.0, %v704
    %v706 = vmul.f32 %v703, %v705
    %v707 = vadd.f32 %v703, %v706
    %vm708 = vweird.f32 %v702
    %vm709 = vweird.f32 %v703
    %vm710 = vmor %vm708, %vm709
    %v711 = vsel %vm710, %v703, %v707
    %v712 = vand.u32 2147483647, %v702
    %vm713 = vcmp.eq.f32.partialorder %v712, 8.507059e+37
    %v714 = vand.u32 %v702, 2147483648
    %v715 = vor.u32 1.1754944e-38, %v714
    %v716 = vsel %vm713, %v715, %v711
    %v717 = vmul.f32 1.0, %v716
    %v718 = vtanh.pop %v678
    %v719 = vxor.u32 %v679, 2147483648
    %v720 = vmul.f32 %v719, 1.442695
    %v721 = vpow.pop %v720
    %v722 = vadd.f32 %v721, 1.0
    %v723 = vrcp.pop %v722
    %v724 = vmul.f32 %v722, %v723
    %v725 = vsub.f32 1.0, %v724
    %v726 = vmul.f32 %v723, %v725
    %v727 = vadd.f32 %v723, %v726
    %vm728 = vweird.f32 %v722
    %vm729 = vweird.f32 %v723
    %vm730 = vmor %vm728, %vm729
    %v731 = vsel %vm730, %v723, %v727
    %v732 = vand.u32 2147483647, %v722
    %vm733 = vcmp.eq.f32.partialorder %v732, 8.507059e+37
    %v734 = vand.u32 %v722, 2147483648
    %v735 = vor.u32 1.1754944e-38, %v734
    %v736 = vsel %vm733, %v735, %v731
    %v737 = vmul.f32 1.0, %v736
    %v738 = vmul.f32 %v717, %v615
    %v739 = vmul.f32 %v698, %v718
    %v740 = vadd.f32 %v738, %v739
    %v741 = vtanh.pop %v740
    %v742 = vmul.f32 %v737, %v741
    %s743 = scalar_lea.vmem [#allocation4], 128
    %v744 = vld [vmem:[%s743] sm:$0xff]
    %v745 = vld [vmem:[%s743 + $0x8] sm:$0xff]
    %v746 = vld [vmem:[%s743 + $0x10] sm:$0xff]
    %v747 = vld [vmem:[%s743 + $0x18] sm:$0xff]
    %v748 = vpack.c.bf16 %v742, %v742
    %749 = vmatpush.bf16.msra.mxu0 %v213
    %750 = vmatpush.bf16.msra.mxu0 %v209
    %751 = vmatpush.bf16.msra.mxu0 %v205
    %752 = vmatpush.bf16.msra.mxu0 %v201
    %753 = vmatpush.bf16.msra.mxu0 %v197
    %754 = vmatpush.bf16.msra.mxu0 %v193
    %755 = vmatpush.bf16.msra.mxu0 %v189
    %756 = vmatpush.bf16.msra.mxu0 %v185
    %757 = vmatmul.bf16.gmra.mxu0 %v748
    %v758 = vpop.f32.mrf.mxu0
    %v759 = vadd.f32 0.0, %v758
    %v760 = vpop.f32.mrf.mxu0
    %761 = vdwg.mxu0
    %762 = vmatpush.bf16.msra.mxu0 %v214
    %763 = vmatpush.bf16.msra.mxu0 %v210
    %764 = vmatpush.bf16.msra.mxu0 %v206
    %765 = vmatpush.bf16.msra.mxu0 %v202
    %766 = vmatpush.bf16.msra.mxu0 %v198
    %767 = vmatpush.bf16.msra.mxu0 %v194
    %768 = vmatpush.bf16.msra.mxu0 %v190
    %769 = vmatpush.bf16.msra.mxu0 %v186
    %770 = vmatmul.bf16.gmra.mxu0 %v748
    %v771 = vpop.f32.mrf.mxu0
    %v772 = vadd.f32 0.0, %v771
    %v773 = vpop.f32.mrf.mxu0
    %774 = vdwg.mxu0
    %775 = vmatpush.bf16.msra.mxu0 %v215
    %776 = vmatpush.bf16.msra.mxu0 %v211
    %777 = vmatpush.bf16.msra.mxu0 %v207
    %778 = vmatpush.bf16.msra.mxu0 %v203
    %779 = vmatpush.bf16.msra.mxu0 %v199
    %780 = vmatpush.bf16.msra.mxu0 %v195
    %781 = vmatpush.bf16.msra.mxu0 %v191
    %782 = vmatpush.bf16.msra.mxu0 %v187
    %783 = vmatmul.bf16.gmra.mxu0 %v748
    %v784 = vpop.f32.mrf.mxu0
    %v785 = vadd.f32 0.0, %v784
    %v786 = vpop.f32.mrf.mxu0
    %787 = vdwg.mxu0
    %788 = vmatpush.bf16.msra.mxu0 %v216
    %789 = vmatpush.bf16.msra.mxu0 %v212
    %790 = vmatpush.bf16.msra.mxu0 %v208
    %791 = vmatpush.bf16.msra.mxu0 %v204
    %792 = vmatpush.bf16.msra.mxu0 %v200
    %793 = vmatpush.bf16.msra.mxu0 %v196
    %794 = vmatpush.bf16.msra.mxu0 %v192
    %795 = vmatpush.bf16.msra.mxu0 %v188
    %796 = vmatmul.bf16.gmra.mxu0 %v748
    %v797 = vpop.f32.mrf.mxu0
    %v798 = vadd.f32 0.0, %v797
    %v799 = vpop.f32.mrf.mxu0
    %800 = vdwg.mxu0
    %v801 = vadd.f32 %v744, %v759
    %v802 = vadd.f32 %v745, %v772
    %v803 = vadd.f32 %v746, %v785
    %v804 = vadd.f32 %v747, %v798
    %v805 = vxor.u32 %v801, 2147483648
    %v806 = vmul.f32 %v805, 1.442695
    %v807 = vpow.pop %v806
    %v808 = vadd.f32 %v807, 1.0
    %v809 = vrcp.pop %v808
    %v810 = vmul.f32 %v808, %v809
    %v811 = vsub.f32 1.0, %v810
    %v812 = vmul.f32 %v809, %v811
    %v813 = vadd.f32 %v809, %v812
    %vm814 = vweird.f32 %v808
    %vm815 = vweird.f32 %v809
    %vm816 = vmor %vm814, %vm815
    %v817 = vsel %vm816, %v809, %v813
    %v818 = vand.u32 2147483647, %v808
    %vm819 = vcmp.eq.f32.partialorder %v818, 8.507059e+37
    %v820 = vand.u32 %v808, 2147483648
    %v821 = vor.u32 1.1754944e-38, %v820
    %v822 = vsel %vm819, %v821, %v817
    %v823 = vmul.f32 1.0, %v822
    %v824 = vxor.u32 %v802, 2147483648
    %v825 = vmul.f32 %v824, 1.442695
    %v826 = vpow.pop %v825
    %v827 = vadd.f32 %v826, 1.0
    %v828 = vrcp.pop %v827
    %v829 = vmul.f32 %v827, %v828
    %v830 = vsub.f32 1.0, %v829
    %v831 = vmul.f32 %v828, %v830
    %v832 = vadd.f32 %v828, %v831
    %vm833 = vweird.f32 %v827
    %vm834 = vweird.f32 %v828
    %vm835 = vmor %vm833, %vm834
    %v836 = vsel %vm835, %v828, %v832
    %v837 = vand.u32 2147483647, %v827
    %vm838 = vcmp.eq.f32.partialorder %v837, 8.507059e+37
    %v839 = vand.u32 %v827, 2147483648
    %v840 = vor.u32 1.1754944e-38, %v839
    %v841 = vsel %vm838, %v840, %v836
    %v842 = vmul.f32 1.0, %v841
    %v843 = vtanh.pop %v803
    %v844 = vxor.u32 %v804, 2147483648
    %v845 = vmul.f32 %v844, 1.442695
    %v846 = vpow.pop %v845
    %v847 = vadd.f32 %v846, 1.0
    %v848 = vrcp.pop %v847
    %v849 = vmul.f32 %v847, %v848
    %v850 = vsub.f32 1.0, %v849
    %v851 = vmul.f32 %v848, %v850
    %v852 = vadd.f32 %v848, %v851
    %vm853 = vweird.f32 %v847
    %vm854 = vweird.f32 %v848
    %vm855 = vmor %vm853, %vm854
    %v856 = vsel %vm855, %v848, %v852
    %v857 = vand.u32 2147483647, %v847
    %vm858 = vcmp.eq.f32.partialorder %v857, 8.507059e+37
    %v859 = vand.u32 %v847, 2147483648
    %v860 = vor.u32 1.1754944e-38, %v859
    %v861 = vsel %vm858, %v860, %v856
    %v862 = vmul.f32 1.0, %v861
    %v863 = vmul.f32 %v842, %v740
    %v864 = vmul.f32 %v823, %v843
    %v865 = vadd.f32 %v863, %v864
    %v866 = vtanh.pop %v865
    %v867 = vmul.f32 %v862, %v866
    %s868 = scalar_lea.vmem [#allocation4], 160
    %v869 = vld [vmem:[%s868] sm:$0xff]
    %v870 = vld [vmem:[%s868 + $0x8] sm:$0xff]
    %v871 = vld [vmem:[%s868 + $0x10] sm:$0xff]
    %v872 = vld [vmem:[%s868 + $0x18] sm:$0xff]
    %v873 = vpack.c.bf16 %v867, %v867
    %874 = vmatpush.bf16.msra.mxu0 %v213
    %875 = vmatpush.bf16.msra.mxu0 %v209
    %876 = vmatpush.bf16.msra.mxu0 %v205
    %877 = vmatpush.bf16.msra.mxu0 %v201
    %878 = vmatpush.bf16.msra.mxu0 %v197
    %879 = vmatpush.bf16.msra.mxu0 %v193
    %880 = vmatpush.bf16.msra.mxu0 %v189
    %881 = vmatpush.bf16.msra.mxu0 %v185
    %882 = vmatmul.bf16.gmra.mxu0 %v873
    %v883 = vpop.f32.mrf.mxu0
    %v884 = vadd.f32 0.0, %v883
    %v885 = vpop.f32.mrf.mxu0
    %886 = vdwg.mxu0
    %887 = vmatpush.bf16.msra.mxu0 %v214
    %888 = vmatpush.bf16.msra.mxu0 %v210
    %889 = vmatpush.bf16.msra.mxu0 %v206
    %890 = vmatpush.bf16.msra.mxu0 %v202
    %891 = vmatpush.bf16.msra.mxu0 %v198
    %892 = vmatpush.bf16.msra.mxu0 %v194
    %893 = vmatpush.bf16.msra.mxu0 %v190
    %894 = vmatpush.bf16.msra.mxu0 %v186
    %895 = vmatmul.bf16.gmra.mxu0 %v873
    %v896 = vpop.f32.mrf.mxu0
    %v897 = vadd.f32 0.0, %v896
    %v898 = vpop.f32.mrf.mxu0
    %899 = vdwg.mxu0
    %900 = vmatpush.bf16.msra.mxu0 %v215
    %901 = vmatpush.bf16.msra.mxu0 %v211
    %902 = vmatpush.bf16.msra.mxu0 %v207
    %903 = vmatpush.bf16.msra.mxu0 %v203
    %904 = vmatpush.bf16.msra.mxu0 %v199
    %905 = vmatpush.bf16.msra.mxu0 %v195
    %906 = vmatpush.bf16.msra.mxu0 %v191
    %907 = vmatpush.bf16.msra.mxu0 %v187
    %908 = vmatmul.bf16.gmra.mxu0 %v873
    %v909 = vpop.f32.mrf.mxu0
    %v910 = vadd.f32 0.0, %v909
    %v911 = vpop.f32.mrf.mxu0
    %912 = vdwg.mxu0
    %913 = vmatpush.bf16.msra.mxu0 %v216
    %914 = vmatpush.bf16.msra.mxu0 %v212
    %915 = vmatpush.bf16.msra.mxu0 %v208
    %916 = vmatpush.bf16.msra.mxu0 %v204
    %917 = vmatpush.bf16.msra.mxu0 %v200
    %918 = vmatpush.bf16.msra.mxu0 %v196
    %919 = vmatpush.bf16.msra.mxu0 %v192
    %920 = vmatpush.bf16.msra.mxu0 %v188
    %921 = vmatmul.bf16.gmra.mxu0 %v873
    %v922 = vpop.f32.mrf.mxu0
    %v923 = vadd.f32 0.0, %v922
    %v924 = vpop.f32.mrf.mxu0
    %925 = vdwg.mxu0
    %v926 = vadd.f32 %v869, %v884
    %v927 = vadd.f32 %v870, %v897
    %v928 = vadd.f32 %v871, %v910
    %v929 = vadd.f32 %v872, %v923
    %v930 = vxor.u32 %v926, 2147483648
    %v931 = vmul.f32 %v930, 1.442695
    %v932 = vpow.pop %v931
    %v933 = vadd.f32 %v932, 1.0
    %v934 = vrcp.pop %v933
    %v935 = vmul.f32 %v933, %v934
    %v936 = vsub.f32 1.0, %v935
    %v937 = vmul.f32 %v934, %v936
    %v938 = vadd.f32 %v934, %v937
    %vm939 = vweird.f32 %v933
    %vm940 = vweird.f32 %v934
    %vm941 = vmor %vm939, %vm940
    %v942 = vsel %vm941, %v934, %v938
    %v943 = vand.u32 2147483647, %v933
    %vm944 = vcmp.eq.f32.partialorder %v943, 8.507059e+37
    %v945 = vand.u32 %v933, 2147483648
    %v946 = vor.u32 1.1754944e-38, %v945
    %v947 = vsel %vm944, %v946, %v942
    %v948 = vmul.f32 1.0, %v947
    %v949 = vxor.u32 %v927, 2147483648
    %v950 = vmul.f32 %v949, 1.442695
    %v951 = vpow.pop %v950
    %v952 = vadd.f32 %v951, 1.0
    %v953 = vrcp.pop %v952
    %v954 = vmul.f32 %v952, %v953
    %v955 = vsub.f32 1.0, %v954
    %v956 = vmul.f32 %v953, %v955
    %v957 = vadd.f32 %v953, %v956
    %vm958 = vweird.f32 %v952
    %vm959 = vweird.f32 %v953
    %vm960 = vmor %vm958, %vm959
    %v961 = vsel %vm960, %v953, %v957
    %v962 = vand.u32 2147483647, %v952
    %vm963 = vcmp.eq.f32.partialorder %v962, 8.507059e+37
    %v964 = vand.u32 %v952, 2147483648
    %v965 = vor.u32 1.1754944e-38, %v964
    %v966 = vsel %vm963, %v965, %v961
    %v967 = vmul.f32 1.0, %v966
    %v968 = vtanh.pop %v928
    %v969 = vxor.u32 %v929, 2147483648
    %v970 = vmul.f32 %v969, 1.442695
    %v971 = vpow.pop %v970
    %v972 = vadd.f32 %v971, 1.0
    %v973 = vrcp.pop %v972
    %v974 = vmul.f32 %v972, %v973
    %v975 = vsub.f32 1.0, %v974
    %v976 = vmul.f32 %v973, %v975
    %v977 = vadd.f32 %v973, %v976
    %vm978 = vweird.f32 %v972
    %vm979 = vweird.f32 %v973
    %vm980 = vmor %vm978, %vm979
    %v981 = vsel %vm980, %v973, %v977
    %v982 = vand.u32 2147483647, %v972
    %vm983 = vcmp.eq.f32.partialorder %v982, 8.507059e+37
    %v984 = vand.u32 %v972, 2147483648
    %v985 = vor.u32 1.1754944e-38, %v984
    %v986 = vsel %vm983, %v985, %v981
    %v987 = vmul.f32 1.0, %v986
    %v988 = vmul.f32 %v967, %v865
    %v989 = vmul.f32 %v948, %v968
    %v990 = vadd.f32 %v988, %v989
    %v991 = vtanh.pop %v990
    %v992 = vmul.f32 %v987, %v991
    %s993 = scalar_lea.vmem [#allocation4], 192
    %v994 = vld [vmem:[%s993] sm:$0xff]
    %v995 = vld [vmem:[%s993 + $0x8] sm:$0xff]
    %v996 = vld [vmem:[%s993 + $0x10] sm:$0xff]
    %v997 = vld [vmem:[%s993 + $0x18] sm:$0xff]
    %v998 = vpack.c.bf16 %v992, %v992
    %999 = vmatpush.bf16.msra.mxu0 %v213
    %1000 = vmatpush.bf16.msra.mxu0 %v209
    %1001 = vmatpush.bf16.msra.mxu0 %v205
    %1002 = vmatpush.bf16.msra.mxu0 %v201
    %1003 = vmatpush.bf16.msra.mxu0 %v197
    %1004 = vmatpush.bf16.msra.mxu0 %v193
    %1005 = vmatpush.bf16.msra.mxu0 %v189
    %1006 = vmatpush.bf16.msra.mxu0 %v185
    %1007 = vmatmul.bf16.gmra.mxu0 %v998
    %v1008 = vpop.f32.mrf.mxu0
    %v1009 = vadd.f32 0.0, %v1008
    %v1010 = vpop.f32.mrf.mxu0
    %1011 = vdwg.mxu0
    %1012 = vmatpush.bf16.msra.mxu0 %v214
    %1013 = vmatpush.bf16.msra.mxu0 %v210
    %1014 = vmatpush.bf16.msra.mxu0 %v206
    %1015 = vmatpush.bf16.msra.mxu0 %v202
    %1016 = vmatpush.bf16.msra.mxu0 %v198
    %1017 = vmatpush.bf16.msra.mxu0 %v194
    %1018 = vmatpush.bf16.msra.mxu0 %v190
    %1019 = vmatpush.bf16.msra.mxu0 %v186
    %1020 = vmatmul.bf16.gmra.mxu0 %v998
    %v1021 = vpop.f32.mrf.mxu0
    %v1022 = vadd.f32 0.0, %v1021
    %v1023 = vpop.f32.mrf.mxu0
    %1024 = vdwg.mxu0
    %1025 = vmatpush.bf16.msra.mxu0 %v215
    %1026 = vmatpush.bf16.msra.mxu0 %v211
    %1027 = vmatpush.bf16.msra.mxu0 %v207
    %1028 = vmatpush.bf16.msra.mxu0 %v203
    %1029 = vmatpush.bf16.msra.mxu0 %v199
    %1030 = vmatpush.bf16.msra.mxu0 %v195
    %1031 = vmatpush.bf16.msra.mxu0 %v191
    %1032 = vmatpush.bf16.msra.mxu0 %v187
    %1033 = vmatmul.bf16.gmra.mxu0 %v998
    %v1034 = vpop.f32.mrf.mxu0
    %v1035 = vadd.f32 0.0, %v1034
    %v1036 = vpop.f32.mrf.mxu0
    %1037 = vdwg.mxu0
    %1038 = vmatpush.bf16.msra.mxu0 %v216
    %1039 = vmatpush.bf16.msra.mxu0 %v212
    %1040 = vmatpush.bf16.msra.mxu0 %v208
    %1041 = vmatpush.bf16.msra.mxu0 %v204
    %1042 = vmatpush.bf16.msra.mxu0 %v200
    %1043 = vmatpush.bf16.msra.mxu0 %v196
    %1044 = vmatpush.bf16.msra.mxu0 %v192
    %1045 = vmatpush.bf16.msra.mxu0 %v188
    %1046 = vmatmul.bf16.gmra.mxu0 %v998
    %v1047 = vpop.f32.mrf.mxu0
    %v1048 = vadd.f32 0.0, %v1047
    %v1049 = vpop.f32.mrf.mxu0
    %1050 = vdwg.mxu0
    %v1051 = vadd.f32 %v994, %v1009
    %v1052 = vadd.f32 %v995, %v1022
    %v1053 = vadd.f32 %v996, %v1035
    %v1054 = vadd.f32 %v997, %v1048
    %v1055 = vxor.u32 %v1051, 2147483648
    %v1056 = vmul.f32 %v1055, 1.442695
    %v1057 = vpow.pop %v1056
    %v1058 = vadd.f32 %v1057, 1.0
    %v1059 = vrcp.pop %v1058
    %v1060 = vmul.f32 %v1058, %v1059
    %v1061 = vsub.f32 1.0, %v1060
    %v1062 = vmul.f32 %v1059, %v1061
    %v1063 = vadd.f32 %v1059, %v1062
    %vm1064 = vweird.f32 %v1058
    %vm1065 = vweird.f32 %v1059
    %vm1066 = vmor %vm1064, %vm1065
    %v1067 = vsel %vm1066, %v1059, %v1063
    %v1068 = vand.u32 2147483647, %v1058
    %vm1069 = vcmp.eq.f32.partialorder %v1068, 8.507059e+37
    %v1070 = vand.u32 %v1058, 2147483648
    %v1071 = vor.u32 1.1754944e-38, %v1070
    %v1072 = vsel %vm1069, %v1071, %v1067
    %v1073 = vmul.f32 1.0, %v1072
    %v1074 = vxor.u32 %v1052, 2147483648
    %v1075 = vmul.f32 %v1074, 1.442695
    %v1076 = vpow.pop %v1075
    %v1077 = vadd.f32 %v1076, 1.0
    %v1078 = vrcp.pop %v1077
    %v1079 = vmul.f32 %v1077, %v1078
    %v1080 = vsub.f32 1.0, %v1079
    %v1081 = vmul.f32 %v1078, %v1080
    %v1082 = vadd.f32 %v1078, %v1081
    %vm1083 = vweird.f32 %v1077
    %vm1084 = vweird.f32 %v1078
    %vm1085 = vmor %vm1083, %vm1084
    %v1086 = vsel %vm1085, %v1078, %v1082
    %v1087 = vand.u32 2147483647, %v1077
    %vm1088 = vcmp.eq.f32.partialorder %v1087, 8.507059e+37
    %v1089 = vand.u32 %v1077, 2147483648
    %v1090 = vor.u32 1.1754944e-38, %v1089
    %v1091 = vsel %vm1088, %v1090, %v1086
    %v1092 = vmul.f32 1.0, %v1091
    %v1093 = vtanh.pop %v1053
    %v1094 = vxor.u32 %v1054, 2147483648
    %v1095 = vmul.f32 %v1094, 1.442695
    %v1096 = vpow.pop %v1095
    %v1097 = vadd.f32 %v1096, 1.0
    %v1098 = vrcp.pop %v1097
    %v1099 = vmul.f32 %v1097, %v1098
    %v1100 = vsub.f32 1.0, %v1099
    %v1101 = vmul.f32 %v1098, %v1100
    %v1102 = vadd.f32 %v1098, %v1101
    %vm1103 = vweird.f32 %v1097
    %vm1104 = vweird.f32 %v1098
    %vm1105 = vmor %vm1103, %vm1104
    %v1106 = vsel %vm1105, %v1098, %v1102
    %v1107 = vand.u32 2147483647, %v1097
    %vm1108 = vcmp.eq.f32.partialorder %v1107, 8.507059e+37
    %v1109 = vand.u32 %v1097, 2147483648
    %v1110 = vor.u32 1.1754944e-38, %v1109
    %v1111 = vsel %vm1108, %v1110, %v1106
    %v1112 = vmul.f32 1.0, %v1111
    %v1113 = vmul.f32 %v1092, %v990
    %v1114 = vmul.f32 %v1073, %v1093
    %v1115 = vadd.f32 %v1113, %v1114
    %v1116 = vtanh.pop %v1115
    %v1117 = vmul.f32 %v1112, %v1116
    %s1118 = scalar_lea.vmem [#allocation4], 224
    %v1119 = vld [vmem:[%s1118] sm:$0xff]
    %v1120 = vld [vmem:[%s1118 + $0x8] sm:$0xff]
    %v1121 = vld [vmem:[%s1118 + $0x10] sm:$0xff]
    %v1122 = vld [vmem:[%s1118 + $0x18] sm:$0xff]
    %v1123 = vpack.c.bf16 %v1117, %v1117
    %1124 = vmatpush.bf16.msra.mxu0 %v213
    %1125 = vmatpush.bf16.msra.mxu0 %v209
    %1126 = vmatpush.bf16.msra.mxu0 %v205
    %1127 = vmatpush.bf16.msra.mxu0 %v201
    %1128 = vmatpush.bf16.msra.mxu0 %v197
    %1129 = vmatpush.bf16.msra.mxu0 %v193
    %1130 = vmatpush.bf16.msra.mxu0 %v189
    %1131 = vmatpush.bf16.msra.mxu0 %v185
    %1132 = vmatmul.bf16.gmra.mxu0 %v1123
    %v1133 = vpop.f32.mrf.mxu0
    %v1134 = vadd.f32 0.0, %v1133
    %v1135 = vpop.f32.mrf.mxu0
    %1136 = vdwg.mxu0
    %1137 = vmatpush.bf16.msra.mxu0 %v214
    %1138 = vmatpush.bf16.msra.mxu0 %v210
    %1139 = vmatpush.bf16.msra.mxu0 %v206
    %1140 = vmatpush.bf16.msra.mxu0 %v202
    %1141 = vmatpush.bf16.msra.mxu0 %v198
    %1142 = vmatpush.bf16.msra.mxu0 %v194
    %1143 = vmatpush.bf16.msra.mxu0 %v190
    %1144 = vmatpush.bf16.msra.mxu0 %v186
    %1145 = vmatmul.bf16.gmra.mxu0 %v1123
    %v1146 = vpop.f32.mrf.mxu0
    %v1147 = vadd.f32 0.0, %v1146
    %v1148 = vpop.f32.mrf.mxu0
    %1149 = vdwg.mxu0
    %1150 = vmatpush.bf16.msra.mxu0 %v215
    %1151 = vmatpush.bf16.msra.mxu0 %v211
    %1152 = vmatpush.bf16.msra.mxu0 %v207
    %1153 = vmatpush.bf16.msra.mxu0 %v203
    %1154 = vmatpush.bf16.msra.mxu0 %v199
    %1155 = vmatpush.bf16.msra.mxu0 %v195
    %1156 = vmatpush.bf16.msra.mxu0 %v191
    %1157 = vmatpush.bf16.msra.mxu0 %v187
    %1158 = vmatmul.bf16.gmra.mxu0 %v1123
    %v1159 = vpop.f32.mrf.mxu0
    %v1160 = vadd.f32 0.0, %v1159
    %v1161 = vpop.f32.mrf.mxu0
    %1162 = vdwg.mxu0
    %1163 = vmatpush.bf16.msra.mxu0 %v216
    %1164 = vmatpush.bf16.msra.mxu0 %v212
    %1165 = vmatpush.bf16.msra.mxu0 %v208
    %1166 = vmatpush.bf16.msra.mxu0 %v204
    %1167 = vmatpush.bf16.msra.mxu0 %v200
    %1168 = vmatpush.bf16.msra.mxu0 %v196
    %1169 = vmatpush.bf16.msra.mxu0 %v192
    %1170 = vmatpush.bf16.msra.mxu0 %v188
    %1171 = vmatmul.bf16.gmra.mxu0 %v1123
    %v1172 = vpop.f32.mrf.mxu0
    %v1173 = vadd.f32 0.0, %v1172
    %v1174 = vpop.f32.mrf.mxu0
    %1175 = vdwg.mxu0
    %v1176 = vadd.f32 %v1119, %v1134
    %v1177 = vadd.f32 %v1120, %v1147
    %v1178 = vadd.f32 %v1121, %v1160
    %v1179 = vadd.f32 %v1122, %v1173
    %v1180 = vxor.u32 %v1176, 2147483648
    %v1181 = vmul.f32 %v1180, 1.442695
    %v1182 = vpow.pop %v1181
    %v1183 = vadd.f32 %v1182, 1.0
    %v1184 = vrcp.pop %v1183
    %v1185 = vmul.f32 %v1183, %v1184
    %v1186 = vsub.f32 1.0, %v1185
    %v1187 = vmul.f32 %v1184, %v1186
    %v1188 = vadd.f32 %v1184, %v1187
    %vm1189 = vweird.f32 %v1183
    %vm1190 = vweird.f32 %v1184
    %vm1191 = vmor %vm1189, %vm1190
    %v1192 = vsel %vm1191, %v1184, %v1188
    %v1193 = vand.u32 2147483647, %v1183
    %vm1194 = vcmp.eq.f32.partialorder %v1193, 8.507059e+37
    %v1195 = vand.u32 %v1183, 2147483648
    %v1196 = vor.u32 1.1754944e-38, %v1195
    %v1197 = vsel %vm1194, %v1196, %v1192
    %v1198 = vmul.f32 1.0, %v1197
    %v1199 = vxor.u32 %v1177, 2147483648
    %v1200 = vmul.f32 %v1199, 1.442695
    %v1201 = vpow.pop %v1200
    %v1202 = vadd.f32 %v1201, 1.0
    %v1203 = vrcp.pop %v1202
    %v1204 = vmul.f32 %v1202, %v1203
    %v1205 = vsub.f32 1.0, %v1204
    %v1206 = vmul.f32 %v1203, %v1205
    %v1207 = vadd.f32 %v1203, %v1206
    %vm1208 = vweird.f32 %v1202
    %vm1209 = vweird.f32 %v1203
    %vm1210 = vmor %vm1208, %vm1209
    %v1211 = vsel %vm1210, %v1203, %v1207
    %v1212 = vand.u32 2147483647, %v1202
    %vm1213 = vcmp.eq.f32.partialorder %v1212, 8.507059e+37
    %v1214 = vand.u32 %v1202, 2147483648
    %v1215 = vor.u32 1.1754944e-38, %v1214
    %v1216 = vsel %vm1213, %v1215, %v1211
    %v1217 = vmul.f32 1.0, %v1216
    %v1218 = vtanh.pop %v1178
    %v1219 = vxor.u32 %v1179, 2147483648
    %v1220 = vmul.f32 %v1219, 1.442695
    %v1221 = vpow.pop %v1220
    %v1222 = vadd.f32 %v1221, 1.0
    %v1223 = vrcp.pop %v1222
    %v1224 = vmul.f32 %v1222, %v1223
    %v1225 = vsub.f32 1.0, %v1224
    %v1226 = vmul.f32 %v1223, %v1225
    %v1227 = vadd.f32 %v1223, %v1226
    %vm1228 = vweird.f32 %v1222
    %vm1229 = vweird.f32 %v1223
    %vm1230 = vmor %vm1228, %vm1229
    %v1231 = vsel %vm1230, %v1223, %v1227
    %v1232 = vand.u32 2147483647, %v1222
    %vm1233 = vcmp.eq.f32.partialorder %v1232, 8.507059e+37
    %v1234 = vand.u32 %v1222, 2147483648
    %v1235 = vor.u32 1.1754944e-38, %v1234
    %v1236 = vsel %vm1233, %v1235, %v1231
    %v1237 = vmul.f32 1.0, %v1236
    %v1238 = vmul.f32 %v1217, %v1115
    %v1239 = vmul.f32 %v1198, %v1218
    %v1240 = vadd.f32 %v1238, %v1239
    %v1241 = vtanh.pop %v1240
    %v1242 = vmul.f32 %v1237, %v1241
    %1243 = vst [vmem:[#allocation2] sm:$0xff] %v1242
    %1244 = vst [vmem:[#allocation3] sm:$0xff] %v1240
    // Predicated region
    $region22: #{tpu_custom_call.1} parent=1 // pred_check
      %p1245 = pneg %p44
    $region23: #{tpu_custom_call.1} parent=1 // pred_check_branch
      %1247 = sbr.rel (%p1245) target = $region25
    $region24: #{tpu_custom_call.1} parent=1 // pred_region
      %1248 = vst [vmem:[#allocation9] sm:$0xff] %v1242
    $region25: #{tpu_custom_call.1} parent=1 // pred_fallthru
      _
    // Predicated region
    $region26: #{tpu_custom_call.1} parent=1 // pred_check
      _
    $region27: #{tpu_custom_call.1} parent=1 // pred_check_branch
      %1250 = sbr.rel (0) target = $region29
    $region28: #{tpu_custom_call.1} parent=1 // pred_region
      %1252 = vsyncadd [#allocation6], 0
      %s1254 = sshll.u32 [#allocation9], 4
      %s1255 = int_to_ptr.vmem [resolvable:$true] %s1254
      %s1256 = sshll.u32 %s2, 4
      %s1257 = int_to_ptr.hbm [resolvable:$true] %s1256
      %1259 = dma.vmem_to_hbm [thread:$0]  %s1255, 128, %s1257, [#allocation6]
    $region29: #{tpu_custom_call.1} parent=1 // pred_fallthru
      _
    // Predicated region
    $region30: #{tpu_custom_call.1} parent=1 // pred_check
      _
    $region31: #{tpu_custom_call.1} parent=1 // pred_check_branch
      %1261 = sbr.rel (0) target = $region33
    $region32: #{tpu_custom_call.1} parent=1 // pred_region
      %1263 = dma.done [#allocation6], 128
    $region33: #{tpu_custom_call.1} parent=1 // pred_fallthru
      _
    %1264 = vsyncpa [#allocation5], 1
    %1265 = vsyncpa [#allocation8], 1
    %1266 = vsyncpa [#allocation6], 1

</llo_original>
